<compile_context>
chip_gen: v6e
topology: v6e:2x2x1
jax: 0.10.0
libtpu: 0.0.40
codegen_flags: <defaults>
</compile_context>

<pallas_src>
import jax
import jax.numpy as jnp
from jax.experimental import pallas as pl
from jax.experimental.pallas import tpu as pltpu

LANE = 128


def _ceil_to(n, m):
    return (n + m - 1) // m * m


# --------------------------------------------------------------------------
# Fused kernel: all attention layers + time-mean + folded BN + FCN MLP
# --------------------------------------------------------------------------
def _fused_kernel(ab_ref,                               # SMEM [1, L] attention biases
                  video_ref, audio_ref,                 # VMEM [bb, T, RGB], [bb, T, AUD]
                  lwx_ref, lwp_ref, lb_ref, law_ref,    # [L,SEG0,SEGH]bf16, [L,LPROWS,SEGH]bf16,
                                                        # [L,1,SEGH]f32, [L,1,SEGH]f32
                  w1x_ref, w1p_ref, b1_ref,             # [SEG0,H1p]bf16, [LPOOL,H1p]bf16, [1,H1p]f32
                  w2_ref, b2_ref, w3_ref, b3_ref,
                  out_ref,                              # [bb, Op] f32
                  xbuf_ref, pooled_ref):                # VMEM [bb*T, SEG0] f32, [bb, LPOOL] f32
    bb, t, rgb = video_ref.shape
    aud = audio_ref.shape[2]
    n_layers, seg0, segh = lwx_ref.shape
    bt = bb * t
    f0 = rgb + aud

    # Assemble the lane-padded raw-feature slab in VMEM (replaces the wrapper
    # concat+pad prologue).  The padded tail must be zeroed: its weight rows
    # are zero, but stale VMEM could hold NaN and NaN*0 == NaN.
    xbuf_ref[:, 0:rgb] = video_ref[...].reshape(bt, rgb)
    xbuf_ref[:, rgb:f0] = audio_ref[...].reshape(bt, aud)
    if f0 < seg0:
        xbuf_ref[:, f0:] = jnp.zeros((bt, seg0 - f0), jnp.float32)

    x_bf = xbuf_ref[...].astype(jnp.bfloat16)     # hoisted once, reused by every layer

    for i in range(n_layers):                     # static unroll; slices are free views
        # Time-varying contribution: one [bt,seg0] x [seg0,segh] MXU pass.
        v = jnp.dot(x_bf, lwx_ref[i],
                    preferred_element_type=jnp.float32).reshape(bb, t, segh)
        if i > 0:
            # Pooled features are constant over time: compute their matmul
            # contribution once per batch row, with K sliced to the i
            # 128-aligned segments that actually exist, then broadcast over T.
            vp = jnp.dot(pooled_ref[:, :i * segh].astype(jnp.bfloat16),
                         lwp_ref[i, :i * segh, :],
                         preferred_element_type=jnp.float32)          # [bb, segh]
            v = v + vp[:, None, :]
        v = jnp.maximum(v + lb_ref[i], 0.0)                           # [bb, t, segh]

        # Attention score: VPU multiply + lane reduce (keep the MXU for the
        # Linear layers); time sits on the lane axis for the softmax
        # reductions; EUP approx reciprocal for the denominator.
        s = jnp.sum(v * law_ref[i], axis=-1) + ab_ref[0, i]           # [bb, t]
        s = s - jnp.max(s, axis=-1, keepdims=True)
        e = jnp.exp(s)
        wgt = e * pl.reciprocal(jnp.sum(e, axis=-1, keepdims=True), approx=True)
        pooled_ref[:, i * segh:(i + 1) * segh] = jnp.sum(v * wgt[:, :, None], axis=1)

    # Head: time-mean over the raw features only (pooled features are already
    # time-constant); eval-BatchNorm is folded into w1x/w1p/b1 at pack time.
    mean_x = jnp.mean(xbuf_ref[...].reshape(bb, t, seg0), axis=1)     # [bb, seg0]
    h = (jnp.dot(mean_x.astype(jnp.bfloat16), w1x_ref[...],
                 preferred_element_type=jnp.float32)
         + jnp.dot(pooled_ref[...].astype(jnp.bfloat16), w1p_ref[...],
                   preferred_element_type=jnp.float32)
         + b1_ref[...])
    h = jnp.maximum(h, 0.0)
    # TODO(synk): FCN dropout omitted — eval-mode identity.
    h = jnp.maximum(jnp.dot(h.astype(jnp.bfloat16), w2_ref[...],
                            preferred_element_type=jnp.float32) + b2_ref[...], 0.0)
    out_ref[...] = jnp.dot(h.astype(jnp.bfloat16), w3_ref[...],
                           preferred_element_type=jnp.float32) + b3_ref[...]


# --------------------------------------------------------------------------
# Parameter packing: natural (PyTorch-like) shapes -> lane-padded TPU layout
# --------------------------------------------------------------------------
def pack_params(params):
    layers = params["layers"]
    L = len(layers)
    F0, H = layers[0][0].shape                 # first Linear: [F0, H]
    SEG0 = _ceil_to(F0, LANE)
    SEGH = _ceil_to(H, LANE)
    LPOOL = L * SEGH                           # pooled-feature slab width
    LPROWS = max(1, L - 1) * SEGH              # max pooled-K any layer consumes

    def pad2(a, rows, cols):
        return jnp.pad(a, ((0, rows - a.shape[0]), (0, cols - a.shape[1])))

    lwx, lwp, lb, law, ab = [], [], [], [], []
    for i, (w, b, wa, ba) in enumerate(layers):
        lwx.append(pad2(w[:F0], SEG0, SEGH))                     # x-feature rows
        wp = jnp.zeros((LPROWS, SEGH), jnp.float32)              # pooled-feature rows,
        for j in range(i):                                       # scattered to 128-aligned segments
            wp = wp.at[j * SEGH: j * SEGH + H, :H].set(w[F0 + j * H: F0 + (j + 1) * H])
        lwp.append(wp)
        lb.append(pad2(b[None, :], 1, SEGH))
        law.append(pad2(wa.T, 1, SEGH))
        ab.append(jnp.asarray(ba, jnp.float32))

    gamma, beta, mean, var, w1, b1, w2, b2, w3, b3 = params["head"]
    # Fold BatchNorm1d (eval, running stats) into the first FC layer.
    scale = gamma * jax.lax.rsqrt(var + 1e-5)
    shift = beta - mean * scale
    w1f = scale[:, None] * w1
    b1f = b1 + shift @ w1

    H1p = _ceil_to(w1.shape[1], LANE)
    H2p = _ceil_to(w2.shape[1], LANE)
    Op = _ceil_to(w3.shape[1], LANE)

    w1x = pad2(w1f[:F0], SEG0, H1p)
    w1p = jnp.zeros((LPOOL, H1p), jnp.float32)
    for j in range(L):
        w1p = w1p.at[j * SEGH: j * SEGH + H, :w1.shape[1]].set(
            w1f[F0 + j * H: F0 + (j + 1) * H])

    bf16 = jnp.bfloat16
    packed = dict(
        ab=jnp.stack(ab).reshape(1, L).astype(jnp.float32),
        lwx=jnp.stack(lwx).astype(bf16),
        lwp=jnp.stack(lwp).astype(bf16),
        lb=jnp.stack(lb),
        law=jnp.stack(law),
        w1x=w1x.astype(bf16), w1p=w1p.astype(bf16), b1=pad2(b1f[None, :], 1, H1p),
        w2=pad2(w2, H1p, H2p).astype(bf16), b2=pad2(b2[None, :], 1, H2p),
        w3=pad2(w3, H2p, Op).astype(bf16), b3=pad2(b3[None, :], 1, Op),
    )
    dims = dict(L=L, F0=F0, SEG0=SEG0, SEGH=SEGH, LPOOL=LPOOL, LPROWS=LPROWS,
                H1p=H1p, H2p=H2p, Op=Op, O=w3.shape[1])
    return packed, dims


# --------------------------------------------------------------------------
# Wrapper: batch blocking, BlockSpecs, single fused pallas_call
# --------------------------------------------------------------------------
def attention_model_forward(video, audio, params, *, batch_block=32):
    B, T, RGB = video.shape
    AUD = audio.shape[2]
    packed, d = pack_params(params)
    if RGB + AUD != d["F0"]:
        raise ValueError("video/audio feature sizes do not match the parameters")

    # Batch blocking: fill the MXU M dim (bt = bb*T rows), but keep >= 2 grid
    # steps when the batch allows it (v7x splits the "parallel" axis across
    # its two TensorCores).
    if B <= 8:
        bb, Bp = B, B                       # tiny batch: block = full array
    else:
        Bp = _ceil_to(B, 8)
        bb = min(_ceil_to(batch_block, 8), Bp)
        if Bp // bb < 2 and Bp >= 16:
            bb = _ceil_to(Bp // 2, 8)
        Bp = _ceil_to(Bp, bb)
    if Bp != B:
        video = jnp.pad(video, ((0, Bp - B), (0, 0), (0, 0)))
        audio = jnp.pad(audio, ((0, Bp - B), (0, 0), (0, 0)))
    grid = (Bp // bb,)

    # VMEM budget sized from the actual resident buffers (weights may be
    # double-buffered by the pipeline, in/out blocks are double-buffered).
    wbytes = sum(int(v.size) * v.dtype.itemsize for v in packed.values())
    iobytes = 4 * bb * (T * (RGB + AUD) + d["Op"])
    sbytes = 4 * bb * (T * d["SEG0"] + d["LPOOL"])
    est = 2 * wbytes + 2 * iobytes + sbytes + (1 << 20)
    vmem_limit = int(min(64 << 20, max(32 << 20, 2 * est)))

    const = lambda *shape: pl.BlockSpec(shape, lambda b: (0,) * len(shape))

    out = pl.pallas_call(
        _fused_kernel,
        out_shape=jax.ShapeDtypeStruct((Bp, d["Op"]), jnp.float32),
        grid=grid,
        in_specs=[
            pl.BlockSpec(memory_space=pltpu.MemorySpace.SMEM),        # ab
            pl.BlockSpec((bb, T, RGB), lambda b: (b, 0, 0)),          # video
            pl.BlockSpec((bb, T, AUD), lambda b: (b, 0, 0)),          # audio
            const(d["L"], d["SEG0"], d["SEGH"]),                      # lwx
            const(d["L"], d["LPROWS"], d["SEGH"]),                    # lwp
            const(d["L"], 1, d["SEGH"]),                              # lb
            const(d["L"], 1, d["SEGH"]),                              # law
            const(d["SEG0"], d["H1p"]),                               # w1x
            const(d["LPOOL"], d["H1p"]),                              # w1p
            const(1, d["H1p"]),                                       # b1
            const(d["H1p"], d["H2p"]),                                # w2
            const(1, d["H2p"]),                                       # b2
            const(d["H2p"], d["Op"]),                                 # w3
            const(1, d["Op"]),                                        # b3
        ],
        out_specs=pl.BlockSpec((bb, d["Op"]), lambda b: (b, 0)),
        scratch_shapes=[pltpu.VMEM((bb * T, d["SEG0"]), jnp.float32),   # raw-feature slab
                        pltpu.VMEM((bb, d["LPOOL"]), jnp.float32)],     # pooled-feature slab
        compiler_params=pltpu.CompilerParams(
            dimension_semantics=("parallel",),
            vmem_limit_bytes=vmem_limit),
    )(packed["ab"], video, audio, packed["lwx"], packed["lwp"], packed["lb"],
      packed["law"], packed["w1x"], packed["w1p"], packed["b1"],
      packed["w2"], packed["b2"], packed["w3"], packed["b3"])

    return out[:B, :d["O"]]


# --------------------------------------------------------------------------
# Pure-JAX reference (eval-mode semantics of the PyTorch module)
# --------------------------------------------------------------------------
def reference_forward(video, audio, params):
    x = jnp.concatenate([video, audio], axis=2)
    for (w, b, wa, ba) in params["layers"]:
        v = jnp.maximum(x @ w + b, 0.0)                      # [B, T, H]
        s = v @ wa + ba                                      # [B, T, 1]
        wgt = jax.nn.softmax(s, axis=1)
        pooled = jnp.sum(v * wgt, axis=1, keepdims=True)     # [B, 1, H]
        x = jnp.concatenate([x, jnp.broadcast_to(pooled, v.shape)], axis=2)
    gamma, beta, mean, var, w1, b1, w2, b2, w3, b3 = params["head"]
    h = jnp.mean(x, axis=1)
    h = (h - mean) * jax.lax.rsqrt(var + 1e-5) * gamma + beta
    h = jnp.maximum(h @ w1 + b1, 0.0)
    h = jnp.maximum(h @ w2 + b2, 0.0)
    return h @ w3 + b3


# --------------------------------------------------------------------------
# Deterministic synthetic parameter init (natural / PyTorch-like shapes)
# --------------------------------------------------------------------------
def init_params(key, rgb, audio, hidden, layers_number, fc_hidden, output_size):
    def nrm(k, shape, scale=0.05):
        return scale * jax.random.normal(k, shape, dtype=jnp.float32)

    base = rgb + audio
    params = {"layers": [], "head": None}
    k = key
    for i in range(layers_number):
        fin = base + hidden * i
        k, k1, k2, k3, k4 = jax.random.split(k, 5)
        params["layers"].append((nrm(k1, (fin, hidden)), nrm(k2, (hidden,)),
                                 nrm(k3, (hidden, 1)), nrm(k4, ())))

    f_final = base + hidden * layers_number
    k, kg, kb, km, kv, k1, k2, k3, k4, k5, k6 = jax.random.split(k, 11)
    gamma = 1.0 + 0.1 * jax.random.normal(kg, (f_final,), dtype=jnp.float32)
    beta = 0.1 * jax.random.normal(kb, (f_final,), dtype=jnp.float32)
    mean = 0.1 * jax.random.normal(km, (f_final,), dtype=jnp.float32)
    var = 1.0 + 0.1 * jax.random.uniform(kv, (f_final,), dtype=jnp.float32)

    h1, h2 = fc_hidden
    params["head"] = (gamma, beta, mean, var,
                      nrm(k1, (f_final, h1)), nrm(k2, (h1,)),
                      nrm(k3, (h1, h2)), nrm(k4, (h2,)),
                      nrm(k5, (h2, output_size)), nrm(k6, (output_size,)))
    return params


# --------------------------------------------------------------------------
if __name__ == "__main__":
    # small shapes consistent with the module's forward
    B, T = 2, 8
    RGB, AUDIO = 32, 16
    HIDDEN = 32
    LAYERS = 3          # module default layers_number=3
    FC_HIDDEN = (64, 64)
    OUT = 20

    key = jax.random.PRNGKey(0)
    k_v, k_a, k_p, k_v2, k_a2 = jax.random.split(key, 5)
    video = jax.random.normal(k_v, (B, T, RGB), dtype=jnp.float32)
    audio = jax.random.normal(k_a, (B, T, AUDIO), dtype=jnp.float32)
    params = init_params(k_p, RGB, AUDIO, HIDDEN, LAYERS, FC_HIDDEN, OUT)

    fwd = jax.jit(attention_model_forward)

    logits = jax.block_until_ready(fwd(video, audio, params))
    assert logits.shape == (B, OUT), logits.shape
    assert bool(jnp.all(jnp.isfinite(logits)))
    ref = reference_forward(video, audio, params)
    assert bool(jnp.allclose(logits, ref, rtol=3e-2, atol=5e-3)), (
        float(jnp.max(jnp.abs(logits - ref))))

    # Multi-block path: grid of 2 batch blocks (bb = 8).
    B2 = 16
    video2 = jax.random.normal(k_v2, (B2, T, RGB), dtype=jnp.float32)
    audio2 = jax.random.normal(k_a2, (B2, T, AUDIO), dtype=jnp.float32)
    logits2 = jax.block_until_ready(fwd(video2, audio2, params))
    ref2 = reference_forward(video2, audio2, params)
    assert logits2.shape == (B2, OUT), logits2.shape
    assert bool(jnp.allclose(logits2, ref2, rtol=3e-2, atol=5e-3)), (
        float(jnp.max(jnp.abs(logits2 - ref2))))

    print("KERNEL_OK")
</pallas_src>

<mosaic_0001>
module attributes {stable_mosaic.version = 11 : i64} {
  func.func @_fused_kernel(%arg0: i32, %arg1: memref<1x3xf32, #tpu.memory_space<smem>>, %arg2: memref<2x8x32xf32, #tpu.memory_space<vmem>>, %arg3: memref<2x8x16xf32, #tpu.memory_space<vmem>>, %arg4: memref<3x128x128xbf16, #tpu.memory_space<vmem>>, %arg5: memref<3x256x128xbf16, #tpu.memory_space<vmem>>, %arg6: memref<3x1x128xf32, #tpu.memory_space<vmem>>, %arg7: memref<3x1x128xf32, #tpu.memory_space<vmem>>, %arg8: memref<128x128xbf16, #tpu.memory_space<vmem>>, %arg9: memref<384x128xbf16, #tpu.memory_space<vmem>>, %arg10: memref<1x128xf32, #tpu.memory_space<vmem>>, %arg11: memref<128x128xbf16, #tpu.memory_space<vmem>>, %arg12: memref<1x128xf32, #tpu.memory_space<vmem>>, %arg13: memref<128x128xbf16, #tpu.memory_space<vmem>>, %arg14: memref<1x128xf32, #tpu.memory_space<vmem>>, %arg15: memref<2x128xf32, #tpu.memory_space<vmem>>, %arg16: memref<16x128xf32, #tpu.memory_space<vmem>>, %arg17: memref<2x384xf32, #tpu.memory_space<vmem>>) attributes {dimension_semantics = [#tpu.dimension_semantics<parallel>], iteration_bounds = array<i64: 1>, scalar_prefetch = 0 : i64, scratch_operands = 2 : i64, tpu.core_type = #tpu.core_type<tc>, window_params = [{transform_indices = @transform_0, window_bounds = array<i64: 1, 3>}, {transform_indices = @transform_1, window_bounds = array<i64: 2, 8, 32>}, {transform_indices = @transform_2, window_bounds = array<i64: 2, 8, 16>}, {pipeline_mode = #tpu.pipeline_mode<synchronous>, transform_indices = @transform_3, window_bounds = array<i64: 3, 128, 128>}, {pipeline_mode = #tpu.pipeline_mode<synchronous>, transform_indices = @transform_4, window_bounds = array<i64: 3, 256, 128>}, {pipeline_mode = #tpu.pipeline_mode<synchronous>, transform_indices = @transform_5, window_bounds = array<i64: 3, 1, 128>}, {pipeline_mode = #tpu.pipeline_mode<synchronous>, transform_indices = @transform_6, window_bounds = array<i64: 3, 1, 128>}, {pipeline_mode = #tpu.pipeline_mode<synchronous>, transform_indices = @transform_7, window_bounds = array<i64: 128, 128>}, {pipeline_mode = #tpu.pipeline_mode<synchronous>, transform_indices = @transform_8, window_bounds = array<i64: 384, 128>}, {pipeline_mode = #tpu.pipeline_mode<synchronous>, transform_indices = @transform_9, window_bounds = array<i64: 1, 128>}, {pipeline_mode = #tpu.pipeline_mode<synchronous>, transform_indices = @transform_10, window_bounds = array<i64: 128, 128>}, {pipeline_mode = #tpu.pipeline_mode<synchronous>, transform_indices = @transform_11, window_bounds = array<i64: 1, 128>}, {pipeline_mode = #tpu.pipeline_mode<synchronous>, transform_indices = @transform_12, window_bounds = array<i64: 128, 128>}, {pipeline_mode = #tpu.pipeline_mode<synchronous>, transform_indices = @transform_13, window_bounds = array<i64: 1, 128>}, {transform_indices = @transform_14, window_bounds = array<i64: 2, 128>}]} {
    %c0 = arith.constant 0 : index
    %c0_0 = arith.constant 0 : index
    %c0_1 = arith.constant 0 : index
    %0 = vector.load %arg2[%c0, %c0_0, %c0_1] : memref<2x8x32xf32, #tpu.memory_space<vmem>>, vector<2x8x32xf32>
    %1 = vector.shape_cast %0 : vector<2x8x32xf32> to vector<16x32xf32>
    %c0_2 = arith.constant 0 : index
    %c0_3 = arith.constant 0 : index
    %2 = vector.load %arg16[%c0_2, %c0_3] : memref<16x128xf32, #tpu.memory_space<vmem>>, vector<16x32xf32>
    tpu.vector_store %arg16[%c0_2, %c0_3], %1 {strides = array<i32>} : memref<16x128xf32, #tpu.memory_space<vmem>>, vector<16x32xf32>,
    %c0_4 = arith.constant 0 : index
    %c0_5 = arith.constant 0 : index
    %c0_6 = arith.constant 0 : index
    %3 = vector.load %arg3[%c0_4, %c0_5, %c0_6] : memref<2x8x16xf32, #tpu.memory_space<vmem>>, vector<2x8x16xf32>
    %4 = vector.shape_cast %3 : vector<2x8x16xf32> to vector<16x16xf32>
    %c0_7 = arith.constant 0 : index
    %c32 = arith.constant 32 : index
    %5 = vector.load %arg16[%c0_7, %c32] : memref<16x128xf32, #tpu.memory_space<vmem>>, vector<16x16xf32>
    tpu.vector_store %arg16[%c0_7, %c32], %4 {strides = array<i32>} : memref<16x128xf32, #tpu.memory_space<vmem>>, vector<16x16xf32>,
    %cst = arith.constant 0.000000e+00 : f32
    %6 = vector.broadcast %cst : f32 to vector<16x80xf32>
    %c0_8 = arith.constant 0 : index
    %c48 = arith.constant 48 : index
    %7 = vector.load %arg16[%c0_8, %c48] : memref<16x128xf32, #tpu.memory_space<vmem>>, vector<16x80xf32>
    tpu.vector_store %arg16[%c0_8, %c48], %6 {strides = array<i32>} : memref<16x128xf32, #tpu.memory_space<vmem>>, vector<16x80xf32>,
    %c0_9 = arith.constant 0 : index
    %c0_10 = arith.constant 0 : index
    %8 = vector.load %arg16[%c0_9, %c0_10] : memref<16x128xf32, #tpu.memory_space<vmem>>, vector<16x128xf32>
    %9 = arith.truncf %8 : vector<16x128xf32> to vector<16x128xbf16>
    %c0_11 = arith.constant 0 : index
    %c0_12 = arith.constant 0 : index
    %c0_13 = arith.constant 0 : index
    %10 = vector.load %arg4[%c0_11, %c0_12, %c0_13] : memref<3x128x128xbf16, #tpu.memory_space<vmem>>, vector<1x128x128xbf16>
    %11 = vector.shape_cast %10 : vector<1x128x128xbf16> to vector<128x128xbf16>
    %cst_14 = arith.constant dense<0.000000e+00> : vector<16x128xf32>
    %12 = tpu.matmul %9, %11, %cst_14 {dimension_numbers = #tpu.dot_dimension_numbers<[1], [0], [0], [1], [0, 0, 1, 1], [], []>} : vector<16x128xbf16>, vector<128x128xbf16>, vector<16x128xf32> -> vector<16x128xf32>
    %13 = vector.shape_cast %12 : vector<16x128xf32> to vector<2x8x128xf32>
    %c0_15 = arith.constant 0 : index
    %c0_16 = arith.constant 0 : index
    %c0_17 = arith.constant 0 : index
    %14 = vector.load %arg6[%c0_15, %c0_16, %c0_17] : memref<3x1x128xf32, #tpu.memory_space<vmem>>, vector<1x1x128xf32>
    %15 = vector.shape_cast %14 : vector<1x1x128xf32> to vector<1x128xf32>
    %16 = vector.shape_cast %15 : vector<1x128xf32> to vector<1x1x128xf32>
    %17 = vector.broadcast %16 : vector<1x1x128xf32> to vector<2x8x128xf32>
    %18 = arith.addf %13, %17 : vector<2x8x128xf32>
    %cst_18 = arith.constant 0.000000e+00 : f32
    %19 = vector.broadcast %cst_18 : f32 to vector<2x8x128xf32>
    %20 = arith.maximumf %18, %19 : vector<2x8x128xf32>
    %c0_19 = arith.constant 0 : index
    %c0_20 = arith.constant 0 : index
    %c0_21 = arith.constant 0 : index
    %21 = vector.load %arg7[%c0_19, %c0_20, %c0_21] : memref<3x1x128xf32, #tpu.memory_space<vmem>>, vector<1x1x128xf32>
    %22 = vector.shape_cast %21 : vector<1x1x128xf32> to vector<1x128xf32>
    %23 = vector.shape_cast %22 : vector<1x128xf32> to vector<1x1x128xf32>
    %24 = vector.broadcast %23 : vector<1x1x128xf32> to vector<2x8x128xf32>
    %25 = arith.mulf %20, %24 : vector<2x8x128xf32>
    %cst_22 = arith.constant dense<0.000000e+00> : vector<2x8xf32>
    %26 = vector.multi_reduction <add>, %25, %cst_22 [2] : vector<2x8x128xf32> to vector<2x8xf32>
    %c0_23 = arith.constant 0 : index
    %c0_24 = arith.constant 0 : index
    %27 = memref.load %arg1[%c0_23, %c0_24] : memref<1x3xf32, #tpu.memory_space<smem>>
    %28 = vector.broadcast %27 : f32 to vector<2x8xf32>
    %29 = arith.addf %26, %28 : vector<2x8xf32>
    %cst_25 = arith.constant dense<0xFF800000> : vector<2xf32>
    %30 = vector.multi_reduction <maximumf>, %29, %cst_25 [1] : vector<2x8xf32> to vector<2xf32>
    %31 = vector.shape_cast %30 : vector<2xf32> to vector<2x1xf32>
    %32 = vector.broadcast %31 : vector<2x1xf32> to vector<2x8xf32>
    %33 = arith.subf %29, %32 : vector<2x8xf32>
    %34 = math.exp %33 : vector<2x8xf32>
    %cst_26 = arith.constant dense<0.000000e+00> : vector<2xf32>
    %35 = vector.multi_reduction <add>, %34, %cst_26 [1] : vector<2x8xf32> to vector<2xf32>
    %36 = vector.shape_cast %35 : vector<2xf32> to vector<2x1xf32>
    %37 = tpu.reciprocal %36 {approx = true} : vector<2x1xf32> -> vector<2x1xf32>
    %38 = vector.broadcast %37 : vector<2x1xf32> to vector<2x8xf32>
    %39 = arith.mulf %34, %38 : vector<2x8xf32>
    %40 = vector.shape_cast %39 : vector<2x8xf32> to vector<2x8x1xf32>
    %41 = vector.broadcast %40 : vector<2x8x1xf32> to vector<2x8x128xf32>
    %42 = arith.mulf %20, %41 : vector<2x8x128xf32>
    %cst_27 = arith.constant dense<0.000000e+00> : vector<2x128xf32>
    %43 = vector.multi_reduction <add>, %42, %cst_27 [1] : vector<2x8x128xf32> to vector<2x128xf32>
    %c0_28 = arith.constant 0 : index
    %c0_29 = arith.constant 0 : index
    %44 = vector.load %arg17[%c0_28, %c0_29] : memref<2x384xf32, #tpu.memory_space<vmem>>, vector<2x128xf32>
    tpu.vector_store %arg17[%c0_28, %c0_29], %43 {strides = array<i32>} : memref<2x384xf32, #tpu.memory_space<vmem>>, vector<2x128xf32>,
    %c1 = arith.constant 1 : index
    %c0_30 = arith.constant 0 : index
    %c0_31 = arith.constant 0 : index
    %45 = vector.load %arg4[%c1, %c0_30, %c0_31] : memref<3x128x128xbf16, #tpu.memory_space<vmem>>, vector<1x128x128xbf16>
    %46 = vector.shape_cast %45 : vector<1x128x128xbf16> to vector<128x128xbf16>
    %cst_32 = arith.constant dense<0.000000e+00> : vector<16x128xf32>
    %47 = tpu.matmul %9, %46, %cst_32 {dimension_numbers = #tpu.dot_dimension_numbers<[1], [0], [0], [1], [0, 0, 1, 1], [], []>} : vector<16x128xbf16>, vector<128x128xbf16>, vector<16x128xf32> -> vector<16x128xf32>
    %48 = vector.shape_cast %47 : vector<16x128xf32> to vector<2x8x128xf32>
    %c0_33 = arith.constant 0 : index
    %c0_34 = arith.constant 0 : index
    %49 = vector.load %arg17[%c0_33, %c0_34] : memref<2x384xf32, #tpu.memory_space<vmem>>, vector<2x128xf32>
    %50 = arith.truncf %49 : vector<2x128xf32> to vector<2x128xbf16>
    %c1_35 = arith.constant 1 : index
    %c0_36 = arith.constant 0 : index
    %c0_37 = arith.constant 0 : index
    %51 = vector.load %arg5[%c1_35, %c0_36, %c0_37] : memref<3x256x128xbf16, #tpu.memory_space<vmem>>, vector<1x128x128xbf16>
    %52 = vector.shape_cast %51 : vector<1x128x128xbf16> to vector<128x128xbf16>
    %cst_38 = arith.constant dense<0.000000e+00> : vector<2x128xf32>
    %53 = tpu.matmul %50, %52, %cst_38 {dimension_numbers = #tpu.dot_dimension_numbers<[1], [0], [0], [1], [0, 0, 1, 1], [], []>} : vector<2x128xbf16>, vector<128x128xbf16>, vector<2x128xf32> -> vector<2x128xf32>
    %54 = vector.shape_cast %53 : vector<2x128xf32> to vector<2x1x128xf32>
    %55 = vector.broadcast %54 : vector<2x1x128xf32> to vector<2x8x128xf32>
    %56 = arith.addf %48, %55 : vector<2x8x128xf32>
    %c1_39 = arith.constant 1 : index
    %c0_40 = arith.constant 0 : index
    %c0_41 = arith.constant 0 : index
    %57 = vector.load %arg6[%c1_39, %c0_40, %c0_41] : memref<3x1x128xf32, #tpu.memory_space<vmem>>, vector<1x1x128xf32>
    %58 = vector.shape_cast %57 : vector<1x1x128xf32> to vector<1x128xf32>
    %59 = vector.shape_cast %58 : vector<1x128xf32> to vector<1x1x128xf32>
    %60 = vector.broadcast %59 : vector<1x1x128xf32> to vector<2x8x128xf32>
    %61 = arith.addf %56, %60 : vector<2x8x128xf32>
    %cst_42 = arith.constant 0.000000e+00 : f32
    %62 = vector.broadcast %cst_42 : f32 to vector<2x8x128xf32>
    %63 = arith.maximumf %61, %62 : vector<2x8x128xf32>
    %c1_43 = arith.constant 1 : index
    %c0_44 = arith.constant 0 : index
    %c0_45 = arith.constant 0 : index
    %64 = vector.load %arg7[%c1_43, %c0_44, %c0_45] : memref<3x1x128xf32, #tpu.memory_space<vmem>>, vector<1x1x128xf32>
    %65 = vector.shape_cast %64 : vector<1x1x128xf32> to vector<1x128xf32>
    %66 = vector.shape_cast %65 : vector<1x128xf32> to vector<1x1x128xf32>
    %67 = vector.broadcast %66 : vector<1x1x128xf32> to vector<2x8x128xf32>
    %68 = arith.mulf %63, %67 : vector<2x8x128xf32>
    %cst_46 = arith.constant dense<0.000000e+00> : vector<2x8xf32>
    %69 = vector.multi_reduction <add>, %68, %cst_46 [2] : vector<2x8x128xf32> to vector<2x8xf32>
    %c0_47 = arith.constant 0 : index
    %c1_48 = arith.constant 1 : index
    %70 = memref.load %arg1[%c0_47, %c1_48] : memref<1x3xf32, #tpu.memory_space<smem>>
    %71 = vector.broadcast %70 : f32 to vector<2x8xf32>
    %72 = arith.addf %69, %71 : vector<2x8xf32>
    %cst_49 = arith.constant dense<0xFF800000> : vector<2xf32>
    %73 = vector.multi_reduction <maximumf>, %72, %cst_49 [1] : vector<2x8xf32> to vector<2xf32>
    %74 = vector.shape_cast %73 : vector<2xf32> to vector<2x1xf32>
    %75 = vector.broadcast %74 : vector<2x1xf32> to vector<2x8xf32>
    %76 = arith.subf %72, %75 : vector<2x8xf32>
    %77 = math.exp %76 : vector<2x8xf32>
    %cst_50 = arith.constant dense<0.000000e+00> : vector<2xf32>
    %78 = vector.multi_reduction <add>, %77, %cst_50 [1] : vector<2x8xf32> to vector<2xf32>
    %79 = vector.shape_cast %78 : vector<2xf32> to vector<2x1xf32>
    %80 = tpu.reciprocal %79 {approx = true} : vector<2x1xf32> -> vector<2x1xf32>
    %81 = vector.broadcast %80 : vector<2x1xf32> to vector<2x8xf32>
    %82 = arith.mulf %77, %81 : vector<2x8xf32>
    %83 = vector.shape_cast %82 : vector<2x8xf32> to vector<2x8x1xf32>
    %84 = vector.broadcast %83 : vector<2x8x1xf32> to vector<2x8x128xf32>
    %85 = arith.mulf %63, %84 : vector<2x8x128xf32>
    %cst_51 = arith.constant dense<0.000000e+00> : vector<2x128xf32>
    %86 = vector.multi_reduction <add>, %85, %cst_51 [1] : vector<2x8x128xf32> to vector<2x128xf32>
    %c0_52 = arith.constant 0 : index
    %c128 = arith.constant 128 : index
    %87 = vector.load %arg17[%c0_52, %c128] : memref<2x384xf32, #tpu.memory_space<vmem>>, vector<2x128xf32>
    tpu.vector_store %arg17[%c0_52, %c128], %86 {strides = array<i32>} : memref<2x384xf32, #tpu.memory_space<vmem>>, vector<2x128xf32>,
    %c2 = arith.constant 2 : index
    %c0_53 = arith.constant 0 : index
    %c0_54 = arith.constant 0 : index
    %88 = vector.load %arg4[%c2, %c0_53, %c0_54] : memref<3x128x128xbf16, #tpu.memory_space<vmem>>, vector<1x128x128xbf16>
    %89 = vector.shape_cast %88 : vector<1x128x128xbf16> to vector<128x128xbf16>
    %cst_55 = arith.constant dense<0.000000e+00> : vector<16x128xf32>
    %90 = tpu.matmul %9, %89, %cst_55 {dimension_numbers = #tpu.dot_dimension_numbers<[1], [0], [0], [1], [0, 0, 1, 1], [], []>} : vector<16x128xbf16>, vector<128x128xbf16>, vector<16x128xf32> -> vector<16x128xf32>
    %91 = vector.shape_cast %90 : vector<16x128xf32> to vector<2x8x128xf32>
    %c0_56 = arith.constant 0 : index
    %c0_57 = arith.constant 0 : index
    %92 = vector.load %arg17[%c0_56, %c0_57] : memref<2x384xf32, #tpu.memory_space<vmem>>, vector<2x256xf32>
    %93 = arith.truncf %92 : vector<2x256xf32> to vector<2x256xbf16>
    %c2_58 = arith.constant 2 : index
    %c0_59 = arith.constant 0 : index
    %c0_60 = arith.constant 0 : index
    %94 = vector.load %arg5[%c2_58, %c0_59, %c0_60] : memref<3x256x128xbf16, #tpu.memory_space<vmem>>, vector<1x256x128xbf16>
    %95 = vector.shape_cast %94 : vector<1x256x128xbf16> to vector<256x128xbf16>
    %cst_61 = arith.constant dense<0.000000e+00> : vector<2x128xf32>
    %96 = tpu.matmul %93, %95, %cst_61 {dimension_numbers = #tpu.dot_dimension_numbers<[1], [0], [0], [1], [0, 0, 1, 1], [], []>} : vector<2x256xbf16>, vector<256x128xbf16>, vector<2x128xf32> -> vector<2x128xf32>
    %97 = vector.shape_cast %96 : vector<2x128xf32> to vector<2x1x128xf32>
    %98 = vector.broadcast %97 : vector<2x1x128xf32> to vector<2x8x128xf32>
    %99 = arith.addf %91, %98 : vector<2x8x128xf32>
    %c2_62 = arith.constant 2 : index
    %c0_63 = arith.constant 0 : index
    %c0_64 = arith.constant 0 : index
    %100 = vector.load %arg6[%c2_62, %c0_63, %c0_64] : memref<3x1x128xf32, #tpu.memory_space<vmem>>, vector<1x1x128xf32>
    %101 = vector.shape_cast %100 : vector<1x1x128xf32> to vector<1x128xf32>
    %102 = vector.shape_cast %101 : vector<1x128xf32> to vector<1x1x128xf32>
    %103 = vector.broadcast %102 : vector<1x1x128xf32> to vector<2x8x128xf32>
    %104 = arith.addf %99, %103 : vector<2x8x128xf32>
    %cst_65 = arith.constant 0.000000e+00 : f32
    %105 = vector.broadcast %cst_65 : f32 to vector<2x8x128xf32>
    %106 = arith.maximumf %104, %105 : vector<2x8x128xf32>
    %c2_66 = arith.constant 2 : index
    %c0_67 = arith.constant 0 : index
    %c0_68 = arith.constant 0 : index
    %107 = vector.load %arg7[%c2_66, %c0_67, %c0_68] : memref<3x1x128xf32, #tpu.memory_space<vmem>>, vector<1x1x128xf32>
    %108 = vector.shape_cast %107 : vector<1x1x128xf32> to vector<1x128xf32>
    %109 = vector.shape_cast %108 : vector<1x128xf32> to vector<1x1x128xf32>
    %110 = vector.broadcast %109 : vector<1x1x128xf32> to vector<2x8x128xf32>
    %111 = arith.mulf %106, %110 : vector<2x8x128xf32>
    %cst_69 = arith.constant dense<0.000000e+00> : vector<2x8xf32>
    %112 = vector.multi_reduction <add>, %111, %cst_69 [2] : vector<2x8x128xf32> to vector<2x8xf32>
    %c0_70 = arith.constant 0 : index
    %c2_71 = arith.constant 2 : index
    %113 = memref.load %arg1[%c0_70, %c2_71] : memref<1x3xf32, #tpu.memory_space<smem>>
    %114 = vector.broadcast %113 : f32 to vector<2x8xf32>
    %115 = arith.addf %112, %114 : vector<2x8xf32>
    %cst_72 = arith.constant dense<0xFF800000> : vector<2xf32>
    %116 = vector.multi_reduction <maximumf>, %115, %cst_72 [1] : vector<2x8xf32> to vector<2xf32>
    %117 = vector.shape_cast %116 : vector<2xf32> to vector<2x1xf32>
    %118 = vector.broadcast %117 : vector<2x1xf32> to vector<2x8xf32>
    %119 = arith.subf %115, %118 : vector<2x8xf32>
    %120 = math.exp %119 : vector<2x8xf32>
    %cst_73 = arith.constant dense<0.000000e+00> : vector<2xf32>
    %121 = vector.multi_reduction <add>, %120, %cst_73 [1] : vector<2x8xf32> to vector<2xf32>
    %122 = vector.shape_cast %121 : vector<2xf32> to vector<2x1xf32>
    %123 = tpu.reciprocal %122 {approx = true} : vector<2x1xf32> -> vector<2x1xf32>
    %124 = vector.broadcast %123 : vector<2x1xf32> to vector<2x8xf32>
    %125 = arith.mulf %120, %124 : vector<2x8xf32>
    %126 = vector.shape_cast %125 : vector<2x8xf32> to vector<2x8x1xf32>
    %127 = vector.broadcast %126 : vector<2x8x1xf32> to vector<2x8x128xf32>
    %128 = arith.mulf %106, %127 : vector<2x8x128xf32>
    %cst_74 = arith.constant dense<0.000000e+00> : vector<2x128xf32>
    %129 = vector.multi_reduction <add>, %128, %cst_74 [1] : vector<2x8x128xf32> to vector<2x128xf32>
    %c0_75 = arith.constant 0 : index
    %c256 = arith.constant 256 : index
    %130 = vector.load %arg17[%c0_75, %c256] : memref<2x384xf32, #tpu.memory_space<vmem>>, vector<2x128xf32>
    tpu.vector_store %arg17[%c0_75, %c256], %129 {strides = array<i32>} : memref<2x384xf32, #tpu.memory_space<vmem>>, vector<2x128xf32>,
    %c0_76 = arith.constant 0 : index
    %c0_77 = arith.constant 0 : index
    %131 = vector.load %arg16[%c0_76, %c0_77] : memref<16x128xf32, #tpu.memory_space<vmem>>, vector<16x128xf32>
    %132 = vector.shape_cast %131 : vector<16x128xf32> to vector<2x8x128xf32>
    %cst_78 = arith.constant dense<0.000000e+00> : vector<2x128xf32>
    %133 = vector.multi_reduction <add>, %132, %cst_78 [1] : vector<2x8x128xf32> to vector<2x128xf32>
    %cst_79 = arith.constant 8.000000e+00 : f32
    %134 = vector.broadcast %cst_79 : f32 to vector<2x128xf32>
    %135 = arith.divf %133, %134 : vector<2x128xf32>
    %136 = arith.truncf %135 : vector<2x128xf32> to vector<2x128xbf16>
    %c0_80 = arith.constant 0 : index
    %c0_81 = arith.constant 0 : index
    %137 = vector.load %arg8[%c0_80, %c0_81] : memref<128x128xbf16, #tpu.memory_space<vmem>>, vector<128x128xbf16>
    %cst_82 = arith.constant dense<0.000000e+00> : vector<2x128xf32>
    %138 = tpu.matmul %136, %137, %cst_82 {dimension_numbers = #tpu.dot_dimension_numbers<[1], [0], [0], [1], [0, 0, 1, 1], [], []>} : vector<2x128xbf16>, vector<128x128xbf16>, vector<2x128xf32> -> vector<2x128xf32>
    %c0_83 = arith.constant 0 : index
    %c0_84 = arith.constant 0 : index
    %139 = vector.load %arg17[%c0_83, %c0_84] : memref<2x384xf32, #tpu.memory_space<vmem>>, vector<2x384xf32>
    %140 = arith.truncf %139 : vector<2x384xf32> to vector<2x384xbf16>
    %c0_85 = arith.constant 0 : index
    %c0_86 = arith.constant 0 : index
    %141 = vector.load %arg9[%c0_85, %c0_86] : memref<384x128xbf16, #tpu.memory_space<vmem>>, vector<384x128xbf16>
    %cst_87 = arith.constant dense<0.000000e+00> : vector<2x128xf32>
    %142 = tpu.matmul %140, %141, %cst_87 {dimension_numbers = #tpu.dot_dimension_numbers<[1], [0], [0], [1], [0, 0, 1, 1], [], []>} : vector<2x384xbf16>, vector<384x128xbf16>, vector<2x128xf32> -> vector<2x128xf32>
    %143 = arith.addf %138, %142 : vector<2x128xf32>
    %c0_88 = arith.constant 0 : index
    %c0_89 = arith.constant 0 : index
    %144 = vector.load %arg10[%c0_88, %c0_89] : memref<1x128xf32, #tpu.memory_space<vmem>>, vector<1x128xf32>
    %145 = vector.broadcast %144 : vector<1x128xf32> to vector<2x128xf32>
    %146 = arith.addf %143, %145 : vector<2x128xf32>
    %cst_90 = arith.constant 0.000000e+00 : f32
    %147 = vector.broadcast %cst_90 : f32 to vector<2x128xf32>
    %148 = arith.maximumf %146, %147 : vector<2x128xf32>
    %149 = arith.truncf %148 : vector<2x128xf32> to vector<2x128xbf16>
    %c0_91 = arith.constant 0 : index
    %c0_92 = arith.constant 0 : index
    %150 = vector.load %arg11[%c0_91, %c0_92] : memref<128x128xbf16, #tpu.memory_space<vmem>>, vector<128x128xbf16>
    %cst_93 = arith.constant dense<0.000000e+00> : vector<2x128xf32>
    %151 = tpu.matmul %149, %150, %cst_93 {dimension_numbers = #tpu.dot_dimension_numbers<[1], [0], [0], [1], [0, 0, 1, 1], [], []>} : vector<2x128xbf16>, vector<128x128xbf16>, vector<2x128xf32> -> vector<2x128xf32>
    %c0_94 = arith.constant 0 : index
    %c0_95 = arith.constant 0 : index
    %152 = vector.load %arg12[%c0_94, %c0_95] : memref<1x128xf32, #tpu.memory_space<vmem>>, vector<1x128xf32>
    %153 = vector.broadcast %152 : vector<1x128xf32> to vector<2x128xf32>
    %154 = arith.addf %151, %153 : vector<2x128xf32>
    %cst_96 = arith.constant 0.000000e+00 : f32
    %155 = vector.broadcast %cst_96 : f32 to vector<2x128xf32>
    %156 = arith.maximumf %154, %155 : vector<2x128xf32>
    %157 = arith.truncf %156 : vector<2x128xf32> to vector<2x128xbf16>
    %c0_97 = arith.constant 0 : index
    %c0_98 = arith.constant 0 : index
    %158 = vector.load %arg13[%c0_97, %c0_98] : memref<128x128xbf16, #tpu.memory_space<vmem>>, vector<128x128xbf16>
    %cst_99 = arith.constant dense<0.000000e+00> : vector<2x128xf32>
    %159 = tpu.matmul %157, %158, %cst_99 {dimension_numbers = #tpu.dot_dimension_numbers<[1], [0], [0], [1], [0, 0, 1, 1], [], []>} : vector<2x128xbf16>, vector<128x128xbf16>, vector<2x128xf32> -> vector<2x128xf32>
    %c0_100 = arith.constant 0 : index
    %c0_101 = arith.constant 0 : index
    %160 = vector.load %arg14[%c0_100, %c0_101] : memref<1x128xf32, #tpu.memory_space<vmem>>, vector<1x128xf32>
    %161 = vector.broadcast %160 : vector<1x128xf32> to vector<2x128xf32>
    %162 = arith.addf %159, %161 : vector<2x128xf32>
    %c0_102 = arith.constant 0 : index
    %c0_103 = arith.constant 0 : index
    %163 = vector.load %arg15[%c0_102, %c0_103] : memref<2x128xf32, #tpu.memory_space<vmem>>, vector<2x128xf32>
    tpu.vector_store %arg15[%c0_102, %c0_103], %162 {strides = array<i32>} : memref<2x128xf32, #tpu.memory_space<vmem>>, vector<2x128xf32>,
    return
  }
  func.func @transform_0(%arg0: i32) -> (i32, i32) {
    %c0_i32 = arith.constant 0 : i32
    %c0_i32_0 = arith.constant 0 : i32
    %c0_i32_1 = arith.constant 0 : i32
    return %c0_i32, %c0_i32_0 : i32, i32
  }
  func.func @transform_1(%arg0: i32) -> (i32, i32, i32) {
    %c0_i32 = arith.constant 0 : i32
    %c0_i32_0 = arith.constant 0 : i32
    %c0_i32_1 = arith.constant 0 : i32
    return %arg0, %c0_i32, %c0_i32_0 : i32, i32, i32
  }
  func.func @transform_2(%arg0: i32) -> (i32, i32, i32) {
    %c0_i32 = arith.constant 0 : i32
    %c0_i32_0 = arith.constant 0 : i32
    %c0_i32_1 = arith.constant 0 : i32
    return %arg0, %c0_i32, %c0_i32_0 : i32, i32, i32
  }
  func.func @transform_3(%arg0: i32) -> (i32, i32, i32) {
    %c0_i32 = arith.constant 0 : i32
    %c0_i32_0 = arith.constant 0 : i32
    %c0_i32_1 = arith.constant 0 : i32
    %c0_i32_2 = arith.constant 0 : i32
    return %c0_i32, %c0_i32_0, %c0_i32_1 : i32, i32, i32
  }
  func.func @transform_4(%arg0: i32) -> (i32, i32, i32) {
    %c0_i32 = arith.constant 0 : i32
    %c0_i32_0 = arith.constant 0 : i32
    %c0_i32_1 = arith.constant 0 : i32
    %c0_i32_2 = arith.constant 0 : i32
    return %c0_i32, %c0_i32_0, %c0_i32_1 : i32, i32, i32
  }
  func.func @transform_5(%arg0: i32) -> (i32, i32, i32) {
    %c0_i32 = arith.constant 0 : i32
    %c0_i32_0 = arith.constant 0 : i32
    %c0_i32_1 = arith.constant 0 : i32
    %c0_i32_2 = arith.constant 0 : i32
    return %c0_i32, %c0_i32_0, %c0_i32_1 : i32, i32, i32
  }
  func.func @transform_6(%arg0: i32) -> (i32, i32, i32) {
    %c0_i32 = arith.constant 0 : i32
    %c0_i32_0 = arith.constant 0 : i32
    %c0_i32_1 = arith.constant 0 : i32
    %c0_i32_2 = arith.constant 0 : i32
    return %c0_i32, %c0_i32_0, %c0_i32_1 : i32, i32, i32
  }
  func.func @transform_7(%arg0: i32) -> (i32, i32) {
    %c0_i32 = arith.constant 0 : i32
    %c0_i32_0 = arith.constant 0 : i32
    %c0_i32_1 = arith.constant 0 : i32
    return %c0_i32, %c0_i32_0 : i32, i32
  }
  func.func @transform_8(%arg0: i32) -> (i32, i32) {
    %c0_i32 = arith.constant 0 : i32
    %c0_i32_0 = arith.constant 0 : i32
    %c0_i32_1 = arith.constant 0 : i32
    return %c0_i32, %c0_i32_0 : i32, i32
  }
  func.func @transform_9(%arg0: i32) -> (i32, i32) {
    %c0_i32 = arith.constant 0 : i32
    %c0_i32_0 = arith.constant 0 : i32
    %c0_i32_1 = arith.constant 0 : i32
    return %c0_i32, %c0_i32_0 : i32, i32
  }
  func.func @transform_10(%arg0: i32) -> (i32, i32) {
    %c0_i32 = arith.constant 0 : i32
    %c0_i32_0 = arith.constant 0 : i32
    %c0_i32_1 = arith.constant 0 : i32
    return %c0_i32, %c0_i32_0 : i32, i32
  }
  func.func @transform_11(%arg0: i32) -> (i32, i32) {
    %c0_i32 = arith.constant 0 : i32
    %c0_i32_0 = arith.constant 0 : i32
    %c0_i32_1 = arith.constant 0 : i32
    return %c0_i32, %c0_i32_0 : i32, i32
  }
  func.func @transform_12(%arg0: i32) -> (i32, i32) {
    %c0_i32 = arith.constant 0 : i32
    %c0_i32_0 = arith.constant 0 : i32
    %c0_i32_1 = arith.constant 0 : i32
    return %c0_i32, %c0_i32_0 : i32, i32
  }
  func.func @transform_13(%arg0: i32) -> (i32, i32) {
    %c0_i32 = arith.constant 0 : i32
    %c0_i32_0 = arith.constant 0 : i32
    %c0_i32_1 = arith.constant 0 : i32
    return %c0_i32, %c0_i32_0 : i32, i32
  }
  func.func @transform_14(%arg0: i32) -> (i32, i32) {
    %c0_i32 = arith.constant 0 : i32
    %c0_i32_0 = arith.constant 0 : i32
    return %arg0, %c0_i32 : i32, i32
  }
}

</mosaic_0001>

<llo_original>
// kernel: attention_model_forward.1
$region0: #{attention_model_forward.1}
  #allocation0 [shape = 'u32[]', space=smem, size = 0x4, offset = 0x4, fixed_abs, tag = 'smem constant byte address 0x4 - core index']
  #allocation1 [shape = 'u32[144,128]{1,0:T(1,128)}', space=vmem, size = 0x12000, scoped, tag = 'internal scratch']
  #allocation2 [shape = 'f32[16,128]{1,0:T(8,128)}', space=vmem, size = 0x2000, scoped, tag = 'scratch operand']
  #allocation3 [shape = 'f32[2,384]{1,0:T(2,128)}', space=vmem, size = 0xc00, scoped, tag = 'scratch operand']
  %s0 = inlined_call_operand.vmem [shape: f32[1,3], index: 0, kind: input, shape index: {}]
  %s1 = inlined_call_operand.vmem [shape: f32[2,8,32], index: 1, kind: input, shape index: {}]
  %s2 = inlined_call_operand.vmem [shape: f32[2,8,16], index: 2, kind: input, shape index: {}]
  %s3 = inlined_call_operand.vmem [shape: bf16[3,128,128], index: 3, kind: input, shape index: {}]
  %s4 = inlined_call_operand.vmem [shape: bf16[3,256,128], index: 4, kind: input, shape index: {}]
  %s5 = inlined_call_operand.vmem [shape: f32[3,1,128], index: 5, kind: input, shape index: {}]
  %s6 = inlined_call_operand.vmem [shape: f32[3,1,128], index: 6, kind: input, shape index: {}]
  %s7 = inlined_call_operand.vmem [shape: bf16[128,128], index: 7, kind: input, shape index: {}]
  %s8 = inlined_call_operand.vmem [shape: bf16[384,128], index: 8, kind: input, shape index: {}]
  %s9 = inlined_call_operand.vmem [shape: f32[1,128], index: 9, kind: input, shape index: {}]
  %s10 = inlined_call_operand.vmem [shape: bf16[128,128], index: 10, kind: input, shape index: {}]
  %s11 = inlined_call_operand.vmem [shape: f32[1,128], index: 11, kind: input, shape index: {}]
  %s12 = inlined_call_operand.vmem [shape: bf16[128,128], index: 12, kind: input, shape index: {}]
  %s13 = inlined_call_operand.vmem [shape: f32[1,128], index: 13, kind: input, shape index: {}]
  %s14 = inlined_call_operand.hbm [shape: f32[2,128], index: 14, kind: output, shape index: {}]
  %s15 = sld [smem:[#allocation0]]
  $region70: #{attention_model_forward.1} parent=0
    _
  %s17 = ssub.s32 1, %s15
  %s18 = scalar_select 0, %s17, %s15
  $region1: #{attention_model_forward.1} parent=0
    #allocation4 [shape = 'u8[512]{0}', space=smem, size = 0x200, scoped, tag = 'input window, operand 0, single buffered']
    #allocation5 [shape = 's32[1]{0}', space=sflag, size = 0x4, scoped, tag = 'scoped memory for attention_model_forward.1']
    #allocation6 [shape = 's32[1]{0}', space=sflag, size = 0x4, scoped, tag = 'scoped memory for attention_model_forward.1']
    #allocation7 [shape = 'u8[1024]{0}', space=vmem, size = 0x400, scoped, tag = 'output window, operand 0, single buffered']
    %19 = vsyncpa [#allocation6], 0
    %20 = vsyncpa [#allocation5], 0
    // Predicated region
    $region2: #{attention_model_forward.1} parent=1 // pred_check
      _
    $region3: #{attention_model_forward.1} parent=1 // pred_check_branch
      %22 = sbr.rel (0) target = $region5
    $region4: #{attention_model_forward.1} parent=1 // pred_region
      %s24 = ssub.s32 16, 16
      %25 = vsyncadd [#allocation6], %s24
      %s27 = sshll.u32 %s0, 4
      %s28 = int_to_ptr.vmem [resolvable:$true] %s27
      %30 = dma.vmem_to_smem %s28, 16, [#allocation4], [#allocation6]
    $region5: #{attention_model_forward.1} parent=1 // pred_fallthru
      _
    // Predicated region
    $region6: #{attention_model_forward.1} parent=1 // pred_check
      _
    $region7: #{attention_model_forward.1} parent=1 // pred_check_branch
      %32 = sbr.rel (0) target = $region9
    $region8: #{attention_model_forward.1} parent=1 // pred_region
      _
    $region9: #{attention_model_forward.1} parent=1 // pred_fallthru
      _
    // Predicated region
    $region10: #{attention_model_forward.1} parent=1 // pred_check
      _
    $region11: #{attention_model_forward.1} parent=1 // pred_check_branch
      %34 = sbr.rel (0) target = $region13
    $region12: #{attention_model_forward.1} parent=1 // pred_region
      _
    $region13: #{attention_model_forward.1} parent=1 // pred_fallthru
      _
    // Predicated region
    $region14: #{attention_model_forward.1} parent=1 // pred_check
      _
    $region15: #{attention_model_forward.1} parent=1 // pred_check_branch
      %36 = sbr.rel (0) target = $region17
    $region16: #{attention_model_forward.1} parent=1 // pred_region
      _
    $region17: #{attention_model_forward.1} parent=1 // pred_fallthru
      _
    // Predicated region
    $region18: #{attention_model_forward.1} parent=1 // pred_check
      _
    $region19: #{attention_model_forward.1} parent=1 // pred_check_branch
      %38 = sbr.rel (0) target = $region21
    $region20: #{attention_model_forward.1} parent=1 // pred_region
      _
    $region21: #{attention_model_forward.1} parent=1 // pred_fallthru
      _
    // Predicated region
    $region22: #{attention_model_forward.1} parent=1 // pred_check
      _
    $region23: #{attention_model_forward.1} parent=1 // pred_check_branch
      %40 = sbr.rel (0) target = $region25
    $region24: #{attention_model_forward.1} parent=1 // pred_region
      _
    $region25: #{attention_model_forward.1} parent=1 // pred_fallthru
      _
    // Predicated region
    $region26: #{attention_model_forward.1} parent=1 // pred_check
      _
    $region27: #{attention_model_forward.1} parent=1 // pred_check_branch
      %42 = sbr.rel (0) target = $region29
    $region28: #{attention_model_forward.1} parent=1 // pred_region
      _
    $region29: #{attention_model_forward.1} parent=1 // pred_fallthru
      _
    // Predicated region
    $region30: #{attention_model_forward.1} parent=1 // pred_check
      _
    $region31: #{attention_model_forward.1} parent=1 // pred_check_branch
      %44 = sbr.rel (0) target = $region33
    $region32: #{attention_model_forward.1} parent=1 // pred_region
      _
    $region33: #{attention_model_forward.1} parent=1 // pred_fallthru
      _
    // Predicated region
    $region34: #{attention_model_forward.1} parent=1 // pred_check
      _
    $region35: #{attention_model_forward.1} parent=1 // pred_check_branch
      %46 = sbr.rel (0) target = $region37
    $region36: #{attention_model_forward.1} parent=1 // pred_region
      _
    $region37: #{attention_model_forward.1} parent=1 // pred_fallthru
      _
    // Predicated region
    $region38: #{attention_model_forward.1} parent=1 // pred_check
      _
    $region39: #{attention_model_forward.1} parent=1 // pred_check_branch
      %48 = sbr.rel (0) target = $region41
    $region40: #{attention_model_forward.1} parent=1 // pred_region
      _
    $region41: #{attention_model_forward.1} parent=1 // pred_fallthru
      _
    // Predicated region
    $region42: #{attention_model_forward.1} parent=1 // pred_check
      _
    $region43: #{attention_model_forward.1} parent=1 // pred_check_branch
      %50 = sbr.rel (0) target = $region45
    $region44: #{attention_model_forward.1} parent=1 // pred_region
      _
    $region45: #{attention_model_forward.1} parent=1 // pred_fallthru
      _
    // Predicated region
    $region46: #{attention_model_forward.1} parent=1 // pred_check
      _
    $region47: #{attention_model_forward.1} parent=1 // pred_check_branch
      %52 = sbr.rel (0) target = $region49
    $region48: #{attention_model_forward.1} parent=1 // pred_region
      _
    $region49: #{attention_model_forward.1} parent=1 // pred_fallthru
      _
    // Predicated region
    $region50: #{attention_model_forward.1} parent=1 // pred_check
      _
    $region51: #{attention_model_forward.1} parent=1 // pred_check_branch
      %54 = sbr.rel (0) target = $region53
    $region52: #{attention_model_forward.1} parent=1 // pred_region
      _
    $region53: #{attention_model_forward.1} parent=1 // pred_fallthru
      _
    // Predicated region
    $region54: #{attention_model_forward.1} parent=1 // pred_check
      _
    $region55: #{attention_model_forward.1} parent=1 // pred_check_branch
      %56 = sbr.rel (0) target = $region57
    $region56: #{attention_model_forward.1} parent=1 // pred_region
      _
    $region57: #{attention_model_forward.1} parent=1 // pred_fallthru
      _
    // Predicated region
    $region58: #{attention_model_forward.1} parent=1 // pred_check
      _
    $region59: #{attention_model_forward.1} parent=1 // pred_check_branch
      %58 = sbr.rel (0) target = $region61
    $region60: #{attention_model_forward.1} parent=1 // pred_region
      %59 = dma.done [#allocation6], 16
    $region61: #{attention_model_forward.1} parent=1 // pred_fallthru
      _
    %60 = sfence
    %v62 = vld [vmem:[%s1] sm:$0xff]
    %v63 = vld [vmem:[%s1 + $0x8] sm:$0xff]
    %vm64 = vcmask 261120
    %65 = vst.msk [vmem:[#allocation2] sm:$0xff] %vm64, %v62
    %66 = vst.msk [vmem:[#allocation2 + $0x8] sm:$0xff] %vm64, %v63
    %v67 = vld [vmem:[%s2] sm:$0xff]
    %v68 = vld [vmem:[%s2 + $0x8] sm:$0xff]
    %71 = vrot.lane.b32.xlu0 %v67, 32
    %v72 = vpop.permute.xlu0 %71
    %73 = vrot.lane.b32.xlu0 %v68, 32
    %v74 = vpop.permute.xlu0 %73
    %vm77 = vcmask 392448
    %78 = vst.msk [vmem:[#allocation2] sm:$0xff] %vm77, %v72
    %79 = vst.msk [vmem:[#allocation2 + $0x8] sm:$0xff] %vm77, %v74
    %vm80 = vcmask 1047936
    %81 = vst.msk [vmem:[#allocation2] sm:$0xff] %vm80, 0.0
    %82 = vst.msk [vmem:[#allocation2 + $0x8] sm:$0xff] %vm80, 0.0
    %v83 = vld [vmem:[#allocation2] sm:$0xff]
    %v84 = vld [vmem:[#allocation2 + $0x8] sm:$0xff]
    %v85 = vpack.c.bf16 %v84, %v83
    %v86 = vld [vmem:[%s3] sm:$0xf]
    %v87 = vld [vmem:[%s3 + $0x4] sm:$0xf]
    %v88 = vld [vmem:[%s3 + $0x8] sm:$0xf]
    %v89 = vld [vmem:[%s3 + $0xc] sm:$0xf]
    %v90 = vld [vmem:[%s3 + $0x10] sm:$0xf]
    %v91 = vld [vmem:[%s3 + $0x14] sm:$0xf]
    %v92 = vld [vmem:[%s3 + $0x18] sm:$0xf]
    %v93 = vld [vmem:[%s3 + $0x1c] sm:$0xf]
    %v94 = vld [vmem:[%s3 + $0x20] sm:$0xf]
    %v95 = vld [vmem:[%s3 + $0x24] sm:$0xf]
    %v96 = vld [vmem:[%s3 + $0x28] sm:$0xf]
    %v97 = vld [vmem:[%s3 + $0x2c] sm:$0xf]
    %v98 = vld [vmem:[%s3 + $0x30] sm:$0xf]
    %v99 = vld [vmem:[%s3 + $0x34] sm:$0xf]
    %v100 = vld [vmem:[%s3 + $0x38] sm:$0xf]
    %v101 = vld [vmem:[%s3 + $0x3c] sm:$0xf]
    %v118 = vunpack.c.l.b16 %v86
    %v119 = vunpack.c.l.b16 %v87
    %v120 = vunpack.c.l.b16 %v88
    %v121 = vunpack.c.l.b16 %v89
    %v122 = vunpack.c.l.b16 %v90
    %v123 = vunpack.c.l.b16 %v91
    %v124 = vunpack.c.l.b16 %v92
    %v125 = vunpack.c.l.b16 %v93
    %v126 = vunpack.c.l.b16 %v94
    %v127 = vunpack.c.l.b16 %v95
    %v128 = vunpack.c.l.b16 %v96
    %v129 = vunpack.c.l.b16 %v97
    %v130 = vunpack.c.l.b16 %v98
    %v131 = vunpack.c.l.b16 %v99
    %v132 = vunpack.c.l.b16 %v100
    %v133 = vunpack.c.l.b16 %v101
    %v134 = vpack.c.b16 %v119, %v118
    %v135 = vpack.c.b16 %v121, %v120
    %v136 = vpack.c.b16 %v123, %v122
    %v137 = vpack.c.b16 %v125, %v124
    %v138 = vpack.c.b16 %v127, %v126
    %v139 = vpack.c.b16 %v129, %v128
    %v140 = vpack.c.b16 %v131, %v130
    %v141 = vpack.c.b16 %v133, %v132
    %150 = vmatprep.subr.bf16.mxu0 0
    %151 = vmatpush1.bf16.msra.mxu0 %v141
    %152 = vmatprep.subr.bf16.mxu0 0
    %153 = vmatpush1.bf16.msra.mxu0 %v140
    %154 = vmatprep.subr.bf16.mxu0 0
    %155 = vmatpush1.bf16.msra.mxu0 %v139
    %156 = vmatprep.subr.bf16.mxu0 0
    %157 = vmatpush1.bf16.msra.mxu0 %v138
    %158 = vmatprep.subr.bf16.mxu0 0
    %159 = vmatpush1.bf16.msra.mxu0 %v137
    %160 = vmatprep.subr.bf16.mxu0 0
    %161 = vmatpush1.bf16.msra.mxu0 %v136
    %162 = vmatprep.subr.bf16.mxu0 0
    %163 = vmatpush1.bf16.msra.mxu0 %v135
    %164 = vmatprep.subr.bf16.mxu0 0
    %165 = vmatpush1.bf16.msra.mxu0 %v134
    %166 = vmatprep.subr.bf16.mxu0 0
    %167 = vmatpush2.bf16.msra.mxu0 0
    %168 = vmatprep.subr.bf16.mxu0 0
    %169 = vmatpush2.bf16.msra.mxu0 0
    %170 = vmatprep.subr.bf16.mxu0 0
    %171 = vmatpush2.bf16.msra.mxu0 0
    %172 = vmatprep.subr.bf16.mxu0 0
    %173 = vmatpush2.bf16.msra.mxu0 0
    %174 = vmatprep.subr.bf16.mxu0 0
    %175 = vmatpush2.bf16.msra.mxu0 0
    %176 = vmatprep.subr.bf16.mxu0 0
    %177 = vmatpush2.bf16.msra.mxu0 0
    %178 = vmatprep.subr.bf16.mxu0 0
    %179 = vmatpush2.bf16.msra.mxu0 0
    %180 = vmatprep.subr.bf16.mxu0 0
    %181 = vmatpush2.bf16.msra.mxu0 0
    %182 = vmatprep.mubr.bf16.mxu0 0
    %183 = vmatmul.mubr.bf16.gmra.mxu0 %v85
    %v184 = vpop.f32.mrf.mxu0
    %v185 = vadd.f32 0.0, %v184
    %v186 = vpop.f32.mrf.mxu0
    %v187 = vpop.f32.mrf.mxu0
    %v188 = vadd.f32 0.0, %v187
    %v189 = vpop.f32.mrf.mxu0
    %190 = vdwg.mxu0
    %v191 = vld [vmem:[%s5] sm:$0x1]
    %v193 = vlaneseq
    %v194 = vshrl.u32 %v193, 7
    %v195 = vsub.s32 0, %v194
    %v196 = vrot.slane %v191, %v195
    %v198 = vadd.f32 %v185, %v196
    %v199 = vadd.f32 %v188, %v196
    %v200 = vmax.f32 %v198, 0.0
    %v201 = vmax.f32 %v199, 0.0
    %v202 = vld [vmem:[%s6] sm:$0x1]
    %v204 = vlaneseq
    %v205 = vshrl.u32 %v204, 7
    %v206 = vsub.s32 0, %v205
    %v207 = vrot.slane %v202, %v206
    %v209 = vmul.f32 %v200, %v207
    %v210 = vmul.f32 %v201, %v207
    %211 = vadd.xlane.f32.xlu0 %v209
    %v212 = vpop.xlane.xlu0 %211
    %213 = vadd.xlane.f32.xlu0 %v210
    %v214 = vpop.xlane.xlu0 %213
    %s215 = sld [smem:[#allocation4]]
    %v216 = vstv %s215
    %v217 = vadd.f32 %v212, %v216
    %v218 = vadd.f32 %v214, %v216
    %v221 = vlaneseq
    %v222 = vand.u32 %v221, 127
    %v223 = vlaneseq
    %v224 = vshrl.u32 %v223, 7
    %v225 = vsub.s32 %v222, %v224
    %v226 = vrot.slane %v217, %v225
    %v227 = vlaneseq
    %v228 = vshrl.u32 %v227, 7
    %v229 = vsub.s32 %v222, %v228
    %v230 = vrot.slane %v218, %v229
    %vm231 = vcmask 1041409
    %v232 = vsel %vm231, %v230, %v226
    %vm234 = vcmask 58368
    %v235 = vsel %vm234, %v232, -inf
    %236 = vmax.xlane.f32.xlu0 %v235
    %v237 = vpop.xlane.xlu0 %236
    %v239 = vlaneseq
    %v240 = vshrl.u32 %v239, 7
    %v241 = vsub.s32 0, %v240
    %v242 = vrot.slane %v237, %v241
    %v243 = vlaneseq
    %v244 = vshrl.u32 %v243, 7
    %v245 = vsub.s32 1, %v244
    %v246 = vrot.slane %v237, %v245
    %v249 = vsub.f32 %v217, %v242
    %v250 = vsub.f32 %v218, %v246
    %v251 = vmul.f32 %v249, 1.442695
    %v252 = vpow.pop %v251
    %v253 = vmul.f32 %v250, 1.442695
    %v254 = vpow.pop %v253
    %257 = vset.pattern.permute.xlu0 0
    %258 = vperm.xlu0 %257, %v252
    %v259 = vpop.permute.xlu0 %258
    %260 = vset.pattern.permute.xlu0 0
    %261 = vperm.xlu0 %260, %v254
    %v262 = vpop.permute.xlu0 %261
    %v263 = vlaneseq
    %v264 = vshrl.u32 %v263, 7
    %v265 = vsub.s32 %v222, %v264
    %v266 = vrot.slane %v259, %v265
    %v267 = vlaneseq
    %v268 = vshrl.u32 %v267, 7
    %v269 = vsub.s32 %v222, %v268
    %v270 = vrot.slane %v262, %v269
    %v271 = vsel %vm231, %v270, %v266
    %v273 = vsel %vm234, %v271, 0.0
    %274 = vadd.xlane.f32.xlu0 %v273
    %v275 = vpop.xlane.xlu0 %274
    %v276 = vrcp.pop %v275
    %v278 = vlaneseq
    %v279 = vshrl.u32 %v278, 7
    %v280 = vsub.s32 0, %v279
    %v281 = vrot.slane %v276, %v280
    %v282 = vlaneseq
    %v283 = vshrl.u32 %v282, 7
    %v284 = vsub.s32 1, %v283
    %v285 = vrot.slane %v276, %v284
    %v288 = vmul.f32 %v252, %v281
    %v289 = vmul.f32 %v254, %v285
    %291 = vset.pattern.permute.xlu0 0
    %292 = vperm.xlu0 %291, %v288
    %v293 = vpop.permute.xlu0 %292
    %296 = vset.pattern.permute.xlu0 0
    %297 = vperm.xlu0 %296, %v289
    %v298 = vpop.permute.xlu0 %297
    %v300 = vmul.f32 %v200, %v293
    %v301 = vmul.f32 %v201, %v298
    %v302 = vrot.slane %v300, 4
    %v303 = vadd.f32 %v300, %v302
    %v304 = vrot.slane %v303, 2
    %v305 = vadd.f32 %v303, %v304
    %v306 = vrot.slane %v305, 1
    %v307 = vadd.f32 %v305, %v306
    %v308 = vrot.slane %v301, 4
    %v309 = vadd.f32 %v301, %v308
    %v310 = vrot.slane %v309, 2
    %v311 = vadd.f32 %v309, %v310
    %v312 = vrot.slane %v311, 1
    %v313 = vadd.f32 %v311, %v312
    %v317 = vunpack.c.l.s4 1983009808
    %v318 = vunpack.c.0.s8 %v317
    %v319 = vlaneseq
    %v320 = vshrl.u32 %v319, 7
    %v321 = vsub.s32 %v318, %v320
    %v322 = vrot.slane %v307, %v321
    %v324 = vunpack.c.l.s4 1983009808
    %v325 = vunpack.c.0.s8 %v324
    %v326 = vlaneseq
    %v327 = vshrl.u32 %v326, 7
    %v328 = vsub.s32 %v325, %v327
    %v329 = vrot.slane %v313, %v328
    %vm330 = vcmask 1044484
    %v331 = vsel %vm330, %v322, %v322
    %vm332 = vcmask 1046534
    %v333 = vsel %vm332, %v322, %v331
    %v334 = vrot.slane %v329, 7
    %v335 = vsel %vm231, %v334, %v333
    %vm336 = vcmask 1043459
    %v337 = vsel %vm336, %v334, %v335
    %vm338 = vcmask 1045509
    %v339 = vsel %vm338, %v334, %v337
    %vm340 = vcmask 1047559
    %v341 = vsel %vm340, %v334, %v339
    %343 = vst [vmem:[#allocation3] sm:$0x3] %v341
    %s344 = scalar_lea.vmem %s3, 64
    %v345 = vld [vmem:[%s344] sm:$0xf]
    %v346 = vld [vmem:[%s344 + $0x4] sm:$0xf]
    %v347 = vld [vmem:[%s344 + $0x8] sm:$0xf]
    %v348 = vld [vmem:[%s344 + $0xc] sm:$0xf]
    %v349 = vld [vmem:[%s344 + $0x10] sm:$0xf]
    %v350 = vld [vmem:[%s344 + $0x14] sm:$0xf]
    %v351 = vld [vmem:[%s344 + $0x18] sm:$0xf]
    %v352 = vld [vmem:[%s344 + $0x1c] sm:$0xf]
    %v353 = vld [vmem:[%s344 + $0x20] sm:$0xf]
    %v354 = vld [vmem:[%s344 + $0x24] sm:$0xf]
    %v355 = vld [vmem:[%s344 + $0x28] sm:$0xf]
    %v356 = vld [vmem:[%s344 + $0x2c] sm:$0xf]
    %v357 = vld [vmem:[%s344 + $0x30] sm:$0xf]
    %v358 = vld [vmem:[%s344 + $0x34] sm:$0xf]
    %v359 = vld [vmem:[%s344 + $0x38] sm:$0xf]
    %v360 = vld [vmem:[%s344 + $0x3c] sm:$0xf]
    %v377 = vunpack.c.l.b16 %v345
    %v378 = vunpack.c.l.b16 %v346
    %v379 = vunpack.c.l.b16 %v347
    %v380 = vunpack.c.l.b16 %v348
    %v381 = vunpack.c.l.b16 %v349
    %v382 = vunpack.c.l.b16 %v350
    %v383 = vunpack.c.l.b16 %v351
    %v384 = vunpack.c.l.b16 %v352
    %v385 = vunpack.c.l.b16 %v353
    %v386 = vunpack.c.l.b16 %v354
    %v387 = vunpack.c.l.b16 %v355
    %v388 = vunpack.c.l.b16 %v356
    %v389 = vunpack.c.l.b16 %v357
    %v390 = vunpack.c.l.b16 %v358
    %v391 = vunpack.c.l.b16 %v359
    %v392 = vunpack.c.l.b16 %v360
    %v393 = vpack.c.b16 %v378, %v377
    %v394 = vpack.c.b16 %v380, %v379
    %v395 = vpack.c.b16 %v382, %v381
    %v396 = vpack.c.b16 %v384, %v383
    %v397 = vpack.c.b16 %v386, %v385
    %v398 = vpack.c.b16 %v388, %v387
    %v399 = vpack.c.b16 %v390, %v389
    %v400 = vpack.c.b16 %v392, %v391
    %409 = vmatprep.subr.bf16.mxu0 0
    %410 = vmatpush1.bf16.msra.mxu0 %v400
    %411 = vmatprep.subr.bf16.mxu0 0
    %412 = vmatpush1.bf16.msra.mxu0 %v399
    %413 = vmatprep.subr.bf16.mxu0 0
    %414 = vmatpush1.bf16.msra.mxu0 %v398
    %415 = vmatprep.subr.bf16.mxu0 0
    %416 = vmatpush1.bf16.msra.mxu0 %v397
    %417 = vmatprep.subr.bf16.mxu0 0
    %418 = vmatpush1.bf16.msra.mxu0 %v396
    %419 = vmatprep.subr.bf16.mxu0 0
    %420 = vmatpush1.bf16.msra.mxu0 %v395
    %421 = vmatprep.subr.bf16.mxu0 0
    %422 = vmatpush1.bf16.msra.mxu0 %v394
    %423 = vmatprep.subr.bf16.mxu0 0
    %424 = vmatpush1.bf16.msra.mxu0 %v393
    %425 = vmatprep.subr.bf16.mxu0 0
    %426 = vmatpush2.bf16.msra.mxu0 0
    %427 = vmatprep.subr.bf16.mxu0 0
    %428 = vmatpush2.bf16.msra.mxu0 0
    %429 = vmatprep.subr.bf16.mxu0 0
    %430 = vmatpush2.bf16.msra.mxu0 0
    %431 = vmatprep.subr.bf16.mxu0 0
    %432 = vmatpush2.bf16.msra.mxu0 0
    %433 = vmatprep.subr.bf16.mxu0 0
    %434 = vmatpush2.bf16.msra.mxu0 0
    %435 = vmatprep.subr.bf16.mxu0 0
    %436 = vmatpush2.bf16.msra.mxu0 0
    %437 = vmatprep.subr.bf16.mxu0 0
    %438 = vmatpush2.bf16.msra.mxu0 0
    %439 = vmatprep.subr.bf16.mxu0 0
    %440 = vmatpush2.bf16.msra.mxu0 0
    %441 = vmatprep.mubr.bf16.mxu0 0
    %442 = vmatmul.mubr.bf16.gmra.mxu0 %v85
    %v443 = vpop.f32.mrf.mxu0
    %v444 = vadd.f32 0.0, %v443
    %v445 = vpop.f32.mrf.mxu0
    %v446 = vpop.f32.mrf.mxu0
    %v447 = vadd.f32 0.0, %v446
    %v448 = vpop.f32.mrf.mxu0
    %449 = vdwg.mxu0
    %v450 = vld [vmem:[#allocation3] sm:$0x3]
    %v451 = vpack.c.bf16 %v450, %v450
    %s452 = scalar_lea.vmem %s4, 128
    %v453 = vld [vmem:[%s452] sm:$0xf]
    %v454 = vld [vmem:[%s452 + $0x4] sm:$0xf]
    %v455 = vld [vmem:[%s452 + $0x8] sm:$0xf]
    %v456 = vld [vmem:[%s452 + $0xc] sm:$0xf]
    %v457 = vld [vmem:[%s452 + $0x10] sm:$0xf]
    %v458 = vld [vmem:[%s452 + $0x14] sm:$0xf]
    %v459 = vld [vmem:[%s452 + $0x18] sm:$0xf]
    %v460 = vld [vmem:[%s452 + $0x1c] sm:$0xf]
    %v461 = vld [vmem:[%s452 + $0x20] sm:$0xf]
    %v462 = vld [vmem:[%s452 + $0x24] sm:$0xf]
    %v463 = vld [vmem:[%s452 + $0x28] sm:$0xf]
    %v464 = vld [vmem:[%s452 + $0x2c] sm:$0xf]
    %v465 = vld [vmem:[%s452 + $0x30] sm:$0xf]
    %v466 = vld [vmem:[%s452 + $0x34] sm:$0xf]
    %v467 = vld [vmem:[%s452 + $0x38] sm:$0xf]
    %v468 = vld [vmem:[%s452 + $0x3c] sm:$0xf]
    %v485 = vunpack.c.l.b16 %v453
    %v486 = vunpack.c.l.b16 %v454
    %v487 = vunpack.c.l.b16 %v455
    %v488 = vunpack.c.l.b16 %v456
    %v489 = vunpack.c.l.b16 %v457
    %v490 = vunpack.c.l.b16 %v458
    %v491 = vunpack.c.l.b16 %v459
    %v492 = vunpack.c.l.b16 %v460
    %v493 = vunpack.c.l.b16 %v461
    %v494 = vunpack.c.l.b16 %v462
    %v495 = vunpack.c.l.b16 %v463
    %v496 = vunpack.c.l.b16 %v464
    %v497 = vunpack.c.l.b16 %v465
    %v498 = vunpack.c.l.b16 %v466
    %v499 = vunpack.c.l.b16 %v467
    %v500 = vunpack.c.l.b16 %v468
    %v501 = vpack.c.b16 %v486, %v485
    %v502 = vpack.c.b16 %v488, %v487
    %v503 = vpack.c.b16 %v490, %v489
    %v504 = vpack.c.b16 %v492, %v491
    %v505 = vpack.c.b16 %v494, %v493
    %v506 = vpack.c.b16 %v496, %v495
    %v507 = vpack.c.b16 %v498, %v497
    %v508 = vpack.c.b16 %v500, %v499
    %517 = vmatprep.subr.bf16.mxu0 0
    %518 = vmatpush1.bf16.msra.mxu0 %v508
    %519 = vmatprep.subr.bf16.mxu0 0
    %520 = vmatpush1.bf16.msra.mxu0 %v507
    %521 = vmatprep.subr.bf16.mxu0 0
    %522 = vmatpush1.bf16.msra.mxu0 %v506
    %523 = vmatprep.subr.bf16.mxu0 0
    %524 = vmatpush1.bf16.msra.mxu0 %v505
    %525 = vmatprep.subr.bf16.mxu0 0
    %526 = vmatpush1.bf16.msra.mxu0 %v504
    %527 = vmatprep.subr.bf16.mxu0 0
    %528 = vmatpush1.bf16.msra.mxu0 %v503
    %529 = vmatprep.subr.bf16.mxu0 0
    %530 = vmatpush1.bf16.msra.mxu0 %v502
    %531 = vmatprep.subr.bf16.mxu0 0
    %532 = vmatpush1.bf16.msra.mxu0 %v501
    %533 = vmatprep.subr.bf16.mxu0 0
    %534 = vmatpush2.bf16.msra.mxu0 0
    %535 = vmatprep.subr.bf16.mxu0 0
    %536 = vmatpush2.bf16.msra.mxu0 0
    %537 = vmatprep.subr.bf16.mxu0 0
    %538 = vmatpush2.bf16.msra.mxu0 0
    %539 = vmatprep.subr.bf16.mxu0 0
    %540 = vmatpush2.bf16.msra.mxu0 0
    %541 = vmatprep.subr.bf16.mxu0 0
    %542 = vmatpush2.bf16.msra.mxu0 0
    %543 = vmatprep.subr.bf16.mxu0 0
    %544 = vmatpush2.bf16.msra.mxu0 0
    %545 = vmatprep.subr.bf16.mxu0 0
    %546 = vmatpush2.bf16.msra.mxu0 0
    %547 = vmatprep.subr.bf16.mxu0 0
    %548 = vmatpush2.bf16.msra.mxu0 0
    %549 = vmatprep.mubr.bf16.mxu0 0
    %550 = vmatmul.mubr.bf16.gmra.mxu0 %v451
    %v551 = vpop.f32.mrf.mxu0
    %v552 = vadd.f32 0.0, %v551
    %v553 = vpop.f32.mrf.mxu0
    %v554 = vpop.f32.mrf.mxu0
    %v555 = vpop.f32.mrf.mxu0
    %556 = vdwg.mxu0
    %v559 = vunpack.c.l.s4 1966171168
    %v560 = vunpack.c.0.s8 %v559
    %v561 = vlaneseq
    %v562 = vshrl.u32 %v561, 7
    %v563 = vsub.s32 %v560, %v562
    %v564 = vrot.slane %v552, %v563
    %v565 = vcombine.high %v564, %v564
    %v567 = vunpack.c.l.s4 1966171168
    %v568 = vunpack.c.0.s8 %v567
    %v569 = vlaneseq
    %v570 = vshrl.u32 %v569, 7
    %v571 = vsub.s32 %v568, %v570
    %v572 = vrot.slane %v564, %v571
    %v574 = vunpack.c.l.s4 1966171168
    %v575 = vunpack.c.0.s8 %v574
    %v576 = vlaneseq
    %v577 = vshrl.u32 %v576, 7
    %v578 = vsub.s32 %v575, %v577
    %v579 = vrot.slane %v565, %v578
    %v580 = vlaneseq
    %v581 = vshrl.u32 %v580, 7
    %v582 = vsub.s32 0, %v581
    %v583 = vrot.slane %v572, %v582
    %v584 = vlaneseq
    %v585 = vshrl.u32 %v584, 7
    %v586 = vsub.s32 0, %v585
    %v587 = vrot.slane %v579, %v586
    %v590 = vadd.f32 %v444, %v583
    %v591 = vadd.f32 %v447, %v587
    %s592 = scalar_lea.vmem %s5, 1
    %v593 = vld [vmem:[%s592] sm:$0x1]
    %v595 = vlaneseq
    %v596 = vshrl.u32 %v595, 7
    %v597 = vsub.s32 0, %v596
    %v598 = vrot.slane %v593, %v597
    %v600 = vadd.f32 %v590, %v598
    %v601 = vadd.f32 %v591, %v598
    %v602 = vmax.f32 %v600, 0.0
    %v603 = vmax.f32 %v601, 0.0
    %s604 = scalar_lea.vmem %s6, 1
    %v605 = vld [vmem:[%s604] sm:$0x1]
    %v607 = vlaneseq
    %v608 = vshrl.u32 %v607, 7
    %v609 = vsub.s32 0, %v608
    %v610 = vrot.slane %v605, %v609
    %v612 = vmul.f32 %v602, %v610
    %v613 = vmul.f32 %v603, %v610
    %614 = vadd.xlane.f32.xlu0 %v612
    %v615 = vpop.xlane.xlu0 %614
    %616 = vadd.xlane.f32.xlu0 %v613
    %v617 = vpop.xlane.xlu0 %616
    %s618 = sld [smem:[#allocation4 + $0x1]]
    %v619 = vstv %s618
    %v620 = vadd.f32 %v615, %v619
    %v621 = vadd.f32 %v617, %v619
    %v624 = vlaneseq
    %v625 = vshrl.u32 %v624, 7
    %v626 = vsub.s32 %v222, %v625
    %v627 = vrot.slane %v620, %v626
    %v628 = vlaneseq
    %v629 = vshrl.u32 %v628, 7
    %v630 = vsub.s32 %v222, %v629
    %v631 = vrot.slane %v621, %v630
    %v632 = vsel %vm231, %v631, %v627
    %v634 = vsel %vm234, %v632, -inf
    %635 = vmax.xlane.f32.xlu0 %v634
    %v636 = vpop.xlane.xlu0 %635
    %v638 = vlaneseq
    %v639 = vshrl.u32 %v638, 7
    %v640 = vsub.s32 0, %v639
    %v641 = vrot.slane %v636, %v640
    %v642 = vlaneseq
    %v643 = vshrl.u32 %v642, 7
    %v644 = vsub.s32 1, %v643
    %v645 = vrot.slane %v636, %v644
    %v648 = vsub.f32 %v620, %v641
    %v649 = vsub.f32 %v621, %v645
    %v650 = vmul.f32 %v648, 1.442695
    %v651 = vpow.pop %v650
    %v652 = vmul.f32 %v649, 1.442695
    %v653 = vpow.pop %v652
    %656 = vset.pattern.permute.xlu0 0
    %657 = vperm.xlu0 %656, %v651
    %v658 = vpop.permute.xlu0 %657
    %659 = vset.pattern.permute.xlu0 0
    %660 = vperm.xlu0 %659, %v653
    %v661 = vpop.permute.xlu0 %660
    %v662 = vlaneseq
    %v663 = vshrl.u32 %v662, 7
    %v664 = vsub.s32 %v222, %v663
    %v665 = vrot.slane %v658, %v664
    %v666 = vlaneseq
    %v667 = vshrl.u32 %v666, 7
    %v668 = vsub.s32 %v222, %v667
    %v669 = vrot.slane %v661, %v668
    %v670 = vsel %vm231, %v669, %v665
    %v672 = vsel %vm234, %v670, 0.0
    %673 = vadd.xlane.f32.xlu0 %v672
    %v674 = vpop.xlane.xlu0 %673
    %v675 = vrcp.pop %v674
    %v677 = vlaneseq
    %v678 = vshrl.u32 %v677, 7
    %v679 = vsub.s32 0, %v678
    %v680 = vrot.slane %v675, %v679
    %v681 = vlaneseq
    %v682 = vshrl.u32 %v681, 7
    %v683 = vsub.s32 1, %v682
    %v684 = vrot.slane %v675, %v683
    %v687 = vmul.f32 %v651, %v680
    %v688 = vmul.f32 %v653, %v684
    %690 = vset.pattern.permute.xlu0 0
    %691 = vperm.xlu0 %690, %v687
    %v692 = vpop.permute.xlu0 %691
    %695 = vset.pattern.permute.xlu0 0
    %696 = vperm.xlu0 %695, %v688
    %v697 = vpop.permute.xlu0 %696
    %v699 = vmul.f32 %v602, %v692
    %v700 = vmul.f32 %v603, %v697
    %v701 = vrot.slane %v699, 4
    %v702 = vadd.f32 %v699, %v701
    %v703 = vrot.slane %v702, 2
    %v704 = vadd.f32 %v702, %v703
    %v705 = vrot.slane %v704, 1
    %v706 = vadd.f32 %v704, %v705
    %v707 = vrot.slane %v700, 4
    %v708 = vadd.f32 %v700, %v707
    %v709 = vrot.slane %v708, 2
    %v710 = vadd.f32 %v708, %v709
    %v711 = vrot.slane %v710, 1
    %v712 = vadd.f32 %v710, %v711
    %v716 = vunpack.c.l.s4 1983009808
    %v717 = vunpack.c.0.s8 %v716
    %v718 = vlaneseq
    %v719 = vshrl.u32 %v718, 7
    %v720 = vsub.s32 %v717, %v719
    %v721 = vrot.slane %v706, %v720
    %v723 = vunpack.c.l.s4 1983009808
    %v724 = vunpack.c.0.s8 %v723
    %v725 = vlaneseq
    %v726 = vshrl.u32 %v725, 7
    %v727 = vsub.s32 %v724, %v726
    %v728 = vrot.slane %v712, %v727
    %v729 = vsel %vm330, %v721, %v721
    %v730 = vsel %vm332, %v721, %v729
    %v731 = vrot.slane %v728, 7
    %v732 = vsel %vm231, %v731, %v730
    %v733 = vsel %vm336, %v731, %v732
    %v734 = vsel %vm338, %v731, %v733
    %v735 = vsel %vm340, %v731, %v734
    %737 = vst [vmem:[#allocation3 + $0x2] sm:$0x3] %v735
    %s738 = scalar_lea.vmem %s3, 128
    %v739 = vld [vmem:[%s738] sm:$0xf]
    %v740 = vld [vmem:[%s738 + $0x4] sm:$0xf]
    %v741 = vld [vmem:[%s738 + $0x8] sm:$0xf]
    %v742 = vld [vmem:[%s738 + $0xc] sm:$0xf]
    %v743 = vld [vmem:[%s738 + $0x10] sm:$0xf]
    %v744 = vld [vmem:[%s738 + $0x14] sm:$0xf]
    %v745 = vld [vmem:[%s738 + $0x18] sm:$0xf]
    %v746 = vld [vmem:[%s738 + $0x1c] sm:$0xf]
    %v747 = vld [vmem:[%s738 + $0x20] sm:$0xf]
    %v748 = vld [vmem:[%s738 + $0x24] sm:$0xf]
    %v749 = vld [vmem:[%s738 + $0x28] sm:$0xf]
    %v750 = vld [vmem:[%s738 + $0x2c] sm:$0xf]
    %v751 = vld [vmem:[%s738 + $0x30] sm:$0xf]
    %v752 = vld [vmem:[%s738 + $0x34] sm:$0xf]
    %v753 = vld [vmem:[%s738 + $0x38] sm:$0xf]
    %v754 = vld [vmem:[%s738 + $0x3c] sm:$0xf]
    %v771 = vunpack.c.l.b16 %v739
    %v772 = vunpack.c.l.b16 %v740
    %v773 = vunpack.c.l.b16 %v741
    %v774 = vunpack.c.l.b16 %v742
    %v775 = vunpack.c.l.b16 %v743
    %v776 = vunpack.c.l.b16 %v744
    %v777 = vunpack.c.l.b16 %v745
    %v778 = vunpack.c.l.b16 %v746
    %v779 = vunpack.c.l.b16 %v747
    %v780 = vunpack.c.l.b16 %v748
    %v781 = vunpack.c.l.b16 %v749
    %v782 = vunpack.c.l.b16 %v750
    %v783 = vunpack.c.l.b16 %v751
    %v784 = vunpack.c.l.b16 %v752
    %v785 = vunpack.c.l.b16 %v753
    %v786 = vunpack.c.l.b16 %v754
    %v787 = vpack.c.b16 %v772, %v771
    %v788 = vpack.c.b16 %v774, %v773
    %v789 = vpack.c.b16 %v776, %v775
    %v790 = vpack.c.b16 %v778, %v777
    %v791 = vpack.c.b16 %v780, %v779
    %v792 = vpack.c.b16 %v782, %v781
    %v793 = vpack.c.b16 %v784, %v783
    %v794 = vpack.c.b16 %v786, %v785
    %803 = vmatprep.subr.bf16.mxu0 0
    %804 = vmatpush1.bf16.msra.mxu0 %v794
    %805 = vmatprep.subr.bf16.mxu0 0
    %806 = vmatpush1.bf16.msra.mxu0 %v793
    %807 = vmatprep.subr.bf16.mxu0 0
    %808 = vmatpush1.bf16.msra.mxu0 %v792
    %809 = vmatprep.subr.bf16.mxu0 0
    %810 = vmatpush1.bf16.msra.mxu0 %v791
    %811 = vmatprep.subr.bf16.mxu0 0
    %812 = vmatpush1.bf16.msra.mxu0 %v790
    %813 = vmatprep.subr.bf16.mxu0 0
    %814 = vmatpush1.bf16.msra.mxu0 %v789
    %815 = vmatprep.subr.bf16.mxu0 0
    %816 = vmatpush1.bf16.msra.mxu0 %v788
    %817 = vmatprep.subr.bf16.mxu0 0
    %818 = vmatpush1.bf16.msra.mxu0 %v787
    %819 = vmatprep.subr.bf16.mxu0 0
    %820 = vmatpush2.bf16.msra.mxu0 0
    %821 = vmatprep.subr.bf16.mxu0 0
    %822 = vmatpush2.bf16.msra.mxu0 0
    %823 = vmatprep.subr.bf16.mxu0 0
    %824 = vmatpush2.bf16.msra.mxu0 0
    %825 = vmatprep.subr.bf16.mxu0 0
    %826 = vmatpush2.bf16.msra.mxu0 0
    %827 = vmatprep.subr.bf16.mxu0 0
    %828 = vmatpush2.bf16.msra.mxu0 0
    %829 = vmatprep.subr.bf16.mxu0 0
    %830 = vmatpush2.bf16.msra.mxu0 0
    %831 = vmatprep.subr.bf16.mxu0 0
    %832 = vmatpush2.bf16.msra.mxu0 0
    %833 = vmatprep.subr.bf16.mxu0 0
    %834 = vmatpush2.bf16.msra.mxu0 0
    %835 = vmatprep.mubr.bf16.mxu0 0
    %836 = vmatmul.mubr.bf16.gmra.mxu0 %v85
    %v837 = vpop.f32.mrf.mxu0
    %v838 = vadd.f32 0.0, %v837
    %v839 = vpop.f32.mrf.mxu0
    %v840 = vpop.f32.mrf.mxu0
    %v841 = vadd.f32 0.0, %v840
    %v842 = vpop.f32.mrf.mxu0
    %843 = vdwg.mxu0
    %v844 = vld [vmem:[#allocation3] sm:$0xf]
    %v847 = vunpack.c.l.s4 1983009808
    %v848 = vunpack.c.0.s8 %v847
    %v849 = vlaneseq
    %v850 = vshrl.u32 %v849, 7
    %v851 = vsub.s32 %v848, %v850
    %v852 = vrot.slane %v844, %v851
    %v853 = vcombine.high %v852, %v852
    %v856 = vpack.c.bf16 %v852, %v852
    %v857 = vpack.c.bf16 %v853, %v853
    %s858 = scalar_lea.vmem %s4, 256
    %v859 = vld [vmem:[%s858] sm:$0xf]
    %v860 = vld [vmem:[%s858 + $0x4] sm:$0xf]
    %v861 = vld [vmem:[%s858 + $0x8] sm:$0xf]
    %v862 = vld [vmem:[%s858 + $0xc] sm:$0xf]
    %v863 = vld [vmem:[%s858 + $0x10] sm:$0xf]
    %v864 = vld [vmem:[%s858 + $0x14] sm:$0xf]
    %v865 = vld [vmem:[%s858 + $0x18] sm:$0xf]
    %v866 = vld [vmem:[%s858 + $0x1c] sm:$0xf]
    %v867 = vld [vmem:[%s858 + $0x20] sm:$0xf]
    %v868 = vld [vmem:[%s858 + $0x24] sm:$0xf]
    %v869 = vld [vmem:[%s858 + $0x28] sm:$0xf]
    %v870 = vld [vmem:[%s858 + $0x2c] sm:$0xf]
    %v871 = vld [vmem:[%s858 + $0x30] sm:$0xf]
    %v872 = vld [vmem:[%s858 + $0x34] sm:$0xf]
    %v873 = vld [vmem:[%s858 + $0x38] sm:$0xf]
    %v874 = vld [vmem:[%s858 + $0x3c] sm:$0xf]
    %v875 = vld [vmem:[%s858 + $0x40] sm:$0xf]
    %v876 = vld [vmem:[%s858 + $0x44] sm:$0xf]
    %v877 = vld [vmem:[%s858 + $0x48] sm:$0xf]
    %v878 = vld [vmem:[%s858 + $0x4c] sm:$0xf]
    %v879 = vld [vmem:[%s858 + $0x50] sm:$0xf]
    %v880 = vld [vmem:[%s858 + $0x54] sm:$0xf]
    %v881 = vld [vmem:[%s858 + $0x58] sm:$0xf]
    %v882 = vld [vmem:[%s858 + $0x5c] sm:$0xf]
    %v883 = vld [vmem:[%s858 + $0x60] sm:$0xf]
    %v884 = vld [vmem:[%s858 + $0x64] sm:$0xf]
    %v885 = vld [vmem:[%s858 + $0x68] sm:$0xf]
    %v886 = vld [vmem:[%s858 + $0x6c] sm:$0xf]
    %v887 = vld [vmem:[%s858 + $0x70] sm:$0xf]
    %v888 = vld [vmem:[%s858 + $0x74] sm:$0xf]
    %v889 = vld [vmem:[%s858 + $0x78] sm:$0xf]
    %v890 = vld [vmem:[%s858 + $0x7c] sm:$0xf]
    %v923 = vunpack.c.l.b16 %v859
    %v924 = vunpack.c.l.b16 %v860
    %v925 = vunpack.c.l.b16 %v861
    %v926 = vunpack.c.l.b16 %v862
    %v927 = vunpack.c.l.b16 %v863
    %v928 = vunpack.c.l.b16 %v864
    %v929 = vunpack.c.l.b16 %v865
    %v930 = vunpack.c.l.b16 %v866
    %v931 = vunpack.c.l.b16 %v867
    %v932 = vunpack.c.l.b16 %v868
    %v933 = vunpack.c.l.b16 %v869
    %v934 = vunpack.c.l.b16 %v870
    %v935 = vunpack.c.l.b16 %v871
    %v936 = vunpack.c.l.b16 %v872
    %v937 = vunpack.c.l.b16 %v873
    %v938 = vunpack.c.l.b16 %v874
    %v939 = vunpack.c.l.b16 %v875
    %v940 = vunpack.c.l.b16 %v876
    %v941 = vunpack.c.l.b16 %v877
    %v942 = vunpack.c.l.b16 %v878
    %v943 = vunpack.c.l.b16 %v879
    %v944 = vunpack.c.l.b16 %v880
    %v945 = vunpack.c.l.b16 %v881
    %v946 = vunpack.c.l.b16 %v882
    %v947 = vunpack.c.l.b16 %v883
    %v948 = vunpack.c.l.b16 %v884
    %v949 = vunpack.c.l.b16 %v885
    %v950 = vunpack.c.l.b16 %v886
    %v951 = vunpack.c.l.b16 %v887
    %v952 = vunpack.c.l.b16 %v888
    %v953 = vunpack.c.l.b16 %v889
    %v954 = vunpack.c.l.b16 %v890
    %v955 = vpack.c.b16 %v924, %v923
    %v956 = vpack.c.b16 %v926, %v925
    %v957 = vpack.c.b16 %v928, %v927
    %v958 = vpack.c.b16 %v930, %v929
    %v959 = vpack.c.b16 %v932, %v931
    %v960 = vpack.c.b16 %v934, %v933
    %v961 = vpack.c.b16 %v936, %v935
    %v962 = vpack.c.b16 %v938, %v937
    %v963 = vpack.c.b16 %v940, %v939
    %v964 = vpack.c.b16 %v942, %v941
    %v965 = vpack.c.b16 %v944, %v943
    %v966 = vpack.c.b16 %v946, %v945
    %v967 = vpack.c.b16 %v948, %v947
    %v968 = vpack.c.b16 %v950, %v949
    %v969 = vpack.c.b16 %v952, %v951
    %v970 = vpack.c.b16 %v954, %v953
    %987 = vmatprep.subr.bf16.mxu0 0
    %988 = vmatpush1.bf16.msra.mxu0 %v962
    %989 = vmatprep.subr.bf16.mxu0 0
    %990 = vmatpush1.bf16.msra.mxu0 %v961
    %991 = vmatprep.subr.bf16.mxu0 0
    %992 = vmatpush1.bf16.msra.mxu0 %v960
    %993 = vmatprep.subr.bf16.mxu0 0
    %994 = vmatpush1.bf16.msra.mxu0 %v959
    %995 = vmatprep.subr.bf16.mxu0 0
    %996 = vmatpush1.bf16.msra.mxu0 %v958
    %997 = vmatprep.subr.bf16.mxu0 0
    %998 = vmatpush1.bf16.msra.mxu0 %v957
    %999 = vmatprep.subr.bf16.mxu0 0
    %1000 = vmatpush1.bf16.msra.mxu0 %v956
    %1001 = vmatprep.subr.bf16.mxu0 0
    %1002 = vmatpush1.bf16.msra.mxu0 %v955
    %1003 = vmatprep.subr.bf16.mxu0 0
    %1004 = vmatpush2.bf16.msra.mxu0 %v970
    %1005 = vmatprep.subr.bf16.mxu0 0
    %1006 = vmatpush2.bf16.msra.mxu0 %v969
    %1007 = vmatprep.subr.bf16.mxu0 0
    %1008 = vmatpush2.bf16.msra.mxu0 %v968
    %1009 = vmatprep.subr.bf16.mxu0 0
    %1010 = vmatpush2.bf16.msra.mxu0 %v967
    %1011 = vmatprep.subr.bf16.mxu0 0
    %1012 = vmatpush2.bf16.msra.mxu0 %v966
    %1013 = vmatprep.subr.bf16.mxu0 0
    %1014 = vmatpush2.bf16.msra.mxu0 %v965
    %1015 = vmatprep.subr.bf16.mxu0 0
    %1016 = vmatpush2.bf16.msra.mxu0 %v964
    %1017 = vmatprep.subr.bf16.mxu0 0
    %1018 = vmatpush2.bf16.msra.mxu0 %v963
    %1019 = vmatprep.mubr.bf16.mxu0 %v857
    %1020 = vmatmul.mubr.bf16.gmra.mxu0 %v856
    %v1021 = vpop.f32.mrf.mxu0
    %v1022 = vadd.f32 0.0, %v1021
    %v1023 = vpop.f32.mrf.mxu0
    %v1024 = vpop.f32.mrf.mxu0
    %v1025 = vpop.f32.mrf.mxu0
    %1026 = vdwg.mxu0
    %v1029 = vunpack.c.l.s4 1966171168
    %v1030 = vunpack.c.0.s8 %v1029
    %v1031 = vlaneseq
    %v1032 = vshrl.u32 %v1031, 7
    %v1033 = vsub.s32 %v1030, %v1032
    %v1034 = vrot.slane %v1022, %v1033
    %v1035 = vcombine.high %v1034, %v1034
    %v1037 = vunpack.c.l.s4 1966171168
    %v1038 = vunpack.c.0.s8 %v1037
    %v1039 = vlaneseq
    %v1040 = vshrl.u32 %v1039, 7
    %v1041 = vsub.s32 %v1038, %v1040
    %v1042 = vrot.slane %v1034, %v1041
    %v1044 = vunpack.c.l.s4 1966171168
    %v1045 = vunpack.c.0.s8 %v1044
    %v1046 = vlaneseq
    %v1047 = vshrl.u32 %v1046, 7
    %v1048 = vsub.s32 %v1045, %v1047
    %v1049 = vrot.slane %v1035, %v1048
    %v1050 = vlaneseq
    %v1051 = vshrl.u32 %v1050, 7
    %v1052 = vsub.s32 0, %v1051
    %v1053 = vrot.slane %v1042, %v1052
    %v1054 = vlaneseq
    %v1055 = vshrl.u32 %v1054, 7
    %v1056 = vsub.s32 0, %v1055
    %v1057 = vrot.slane %v1049, %v1056
    %v1060 = vadd.f32 %v838, %v1053
    %v1061 = vadd.f32 %v841, %v1057
    %s1062 = scalar_lea.vmem %s5, 2
    %v1063 = vld [vmem:[%s1062] sm:$0x1]
    %v1065 = vlaneseq
    %v1066 = vshrl.u32 %v1065, 7
    %v1067 = vsub.s32 0, %v1066
    %v1068 = vrot.slane %v1063, %v1067
    %v1070 = vadd.f32 %v1060, %v1068
    %v1071 = vadd.f32 %v1061, %v1068
    %v1072 = vmax.f32 %v1070, 0.0
    %v1073 = vmax.f32 %v1071, 0.0
    %s1074 = scalar_lea.vmem %s6, 2
    %v1075 = vld [vmem:[%s1074] sm:$0x1]
    %v1077 = vlaneseq
    %v1078 = vshrl.u32 %v1077, 7
    %v1079 = vsub.s32 0, %v1078
    %v1080 = vrot.slane %v1075, %v1079
    %v1082 = vmul.f32 %v1072, %v1080
    %v1083 = vmul.f32 %v1073, %v1080
    %1084 = vadd.xlane.f32.xlu0 %v1082
    %v1085 = vpop.xlane.xlu0 %1084
    %1086 = vadd.xlane.f32.xlu0 %v1083
    %v1087 = vpop.xlane.xlu0 %1086
    %s1088 = sld [smem:[#allocation4 + $0x2]]
    %v1089 = vstv %s1088
    %v1090 = vadd.f32 %v1085, %v1089
    %v1091 = vadd.f32 %v1087, %v1089
    %v1094 = vlaneseq
    %v1095 = vshrl.u32 %v1094, 7
    %v1096 = vsub.s32 %v222, %v1095
    %v1097 = vrot.slane %v1090, %v1096
    %v1098 = vlaneseq
    %v1099 = vshrl.u32 %v1098, 7
    %v1100 = vsub.s32 %v222, %v1099
    %v1101 = vrot.slane %v1091, %v1100
    %v1102 = vsel %vm231, %v1101, %v1097
    %v1104 = vsel %vm234, %v1102, -inf
    %1105 = vmax.xlane.f32.xlu0 %v1104
    %v1106 = vpop.xlane.xlu0 %1105
    %v1108 = vlaneseq
    %v1109 = vshrl.u32 %v1108, 7
    %v1110 = vsub.s32 0, %v1109
    %v1111 = vrot.slane %v1106, %v1110
    %v1112 = vlaneseq
    %v1113 = vshrl.u32 %v1112, 7
    %v1114 = vsub.s32 1, %v1113
    %v1115 = vrot.slane %v1106, %v1114
    %v1118 = vsub.f32 %v1090, %v1111
    %v1119 = vsub.f32 %v1091, %v1115
    %v1120 = vmul.f32 %v1118, 1.442695
    %v1121 = vpow.pop %v1120
    %v1122 = vmul.f32 %v1119, 1.442695
    %v1123 = vpow.pop %v1122
    %1126 = vset.pattern.permute.xlu0 0
    %1127 = vperm.xlu0 %1126, %v1121
    %v1128 = vpop.permute.xlu0 %1127
    %1129 = vset.pattern.permute.xlu0 0
    %1130 = vperm.xlu0 %1129, %v1123
    %v1131 = vpop.permute.xlu0 %1130
    %v1132 = vlaneseq
    %v1133 = vshrl.u32 %v1132, 7
    %v1134 = vsub.s32 %v222, %v1133
    %v1135 = vrot.slane %v1128, %v1134
    %v1136 = vlaneseq
    %v1137 = vshrl.u32 %v1136, 7
    %v1138 = vsub.s32 %v222, %v1137
    %v1139 = vrot.slane %v1131, %v1138
    %v1140 = vsel %vm231, %v1139, %v1135
    %v1142 = vsel %vm234, %v1140, 0.0
    %1143 = vadd.xlane.f32.xlu0 %v1142
    %v1144 = vpop.xlane.xlu0 %1143
    %v1145 = vrcp.pop %v1144
    %v1147 = vlaneseq
    %v1148 = vshrl.u32 %v1147, 7
    %v1149 = vsub.s32 0, %v1148
    %v1150 = vrot.slane %v1145, %v1149
    %v1151 = vlaneseq
    %v1152 = vshrl.u32 %v1151, 7
    %v1153 = vsub.s32 1, %v1152
    %v1154 = vrot.slane %v1145, %v1153
    %v1157 = vmul.f32 %v1121, %v1150
    %v1158 = vmul.f32 %v1123, %v1154
    %1160 = vset.pattern.permute.xlu0 0
    %1161 = vperm.xlu0 %1160, %v1157
    %v1162 = vpop.permute.xlu0 %1161
    %1165 = vset.pattern.permute.xlu0 0
    %1166 = vperm.xlu0 %1165, %v1158
    %v1167 = vpop.permute.xlu0 %1166
    %v1169 = vmul.f32 %v1072, %v1162
    %v1170 = vmul.f32 %v1073, %v1167
    %v1171 = vrot.slane %v1169, 4
    %v1172 = vadd.f32 %v1169, %v1171
    %v1173 = vrot.slane %v1172, 2
    %v1174 = vadd.f32 %v1172, %v1173
    %v1175 = vrot.slane %v1174, 1
    %v1176 = vadd.f32 %v1174, %v1175
    %v1177 = vrot.slane %v1170, 4
    %v1178 = vadd.f32 %v1170, %v1177
    %v1179 = vrot.slane %v1178, 2
    %v1180 = vadd.f32 %v1178, %v1179
    %v1181 = vrot.slane %v1180, 1
    %v1182 = vadd.f32 %v1180, %v1181
    %v1186 = vunpack.c.l.s4 1983009808
    %v1187 = vunpack.c.0.s8 %v1186
    %v1188 = vlaneseq
    %v1189 = vshrl.u32 %v1188, 7
    %v1190 = vsub.s32 %v1187, %v1189
    %v1191 = vrot.slane %v1176, %v1190
    %v1193 = vunpack.c.l.s4 1983009808
    %v1194 = vunpack.c.0.s8 %v1193
    %v1195 = vlaneseq
    %v1196 = vshrl.u32 %v1195, 7
    %v1197 = vsub.s32 %v1194, %v1196
    %v1198 = vrot.slane %v1182, %v1197
    %v1199 = vsel %vm330, %v1191, %v1191
    %v1200 = vsel %vm332, %v1191, %v1199
    %v1201 = vrot.slane %v1198, 7
    %v1202 = vsel %vm231, %v1201, %v1200
    %v1203 = vsel %vm336, %v1201, %v1202
    %v1204 = vsel %vm338, %v1201, %v1203
    %v1205 = vsel %vm340, %v1201, %v1204
    %1207 = vst [vmem:[#allocation3 + $0x4] sm:$0x3] %v1205
    %v1208 = vld [vmem:[#allocation2] sm:$0xff]
    %v1209 = vld [vmem:[#allocation2 + $0x8] sm:$0xff]
    %v1210 = vrot.slane %v1208, 4
    %v1211 = vadd.f32 %v1208, %v1210
    %v1212 = vrot.slane %v1211, 2
    %v1213 = vadd.f32 %v1211, %v1212
    %v1214 = vrot.slane %v1213, 1
    %v1215 = vadd.f32 %v1213, %v1214
    %v1216 = vrot.slane %v1209, 4
    %v1217 = vadd.f32 %v1209, %v1216
    %v1218 = vrot.slane %v1217, 2
    %v1219 = vadd.f32 %v1217, %v1218
    %v1220 = vrot.slane %v1219, 1
    %v1221 = vadd.f32 %v1219, %v1220
    %v1222 = vrcp.pop 8.0
    %v1223 = vmul.f32 %v1215, %v1222
    %v1224 = vmul.f32 %v1221, %v1222
    %v1225 = vpack.c.bf16 %v1223, %v1223
    %v1226 = vpack.c.bf16 %v1224, %v1224
    %v1227 = vld [vmem:[%s7] sm:$0xf]
    %v1228 = vld [vmem:[%s7 + $0x4] sm:$0xf]
    %v1229 = vld [vmem:[%s7 + $0x8] sm:$0xf]
    %v1230 = vld [vmem:[%s7 + $0xc] sm:$0xf]
    %v1231 = vld [vmem:[%s7 + $0x10] sm:$0xf]
    %v1232 = vld [vmem:[%s7 + $0x14] sm:$0xf]
    %v1233 = vld [vmem:[%s7 + $0x18] sm:$0xf]
    %v1234 = vld [vmem:[%s7 + $0x1c] sm:$0xf]
    %v1235 = vld [vmem:[%s7 + $0x20] sm:$0xf]
    %v1236 = vld [vmem:[%s7 + $0x24] sm:$0xf]
    %v1237 = vld [vmem:[%s7 + $0x28] sm:$0xf]
    %v1238 = vld [vmem:[%s7 + $0x2c] sm:$0xf]
    %v1239 = vld [vmem:[%s7 + $0x30] sm:$0xf]
    %v1240 = vld [vmem:[%s7 + $0x34] sm:$0xf]
    %v1241 = vld [vmem:[%s7 + $0x38] sm:$0xf]
    %v1242 = vld [vmem:[%s7 + $0x3c] sm:$0xf]
    %v1243 = vld [vmem:[#allocation3] sm:$0x3f]
    %v1245 = vcombine.high %v1243, %v1243
    %v1247 = vunpack.c.l.s4 1983009808
    %v1248 = vunpack.c.0.s8 %v1247
    %v1249 = vlaneseq
    %v1250 = vshrl.u32 %v1249, 7
    %v1251 = vsub.s32 %v1248, %v1250
    %v1252 = vrot.slane %v1243, %v1251
    %v1254 = vunpack.c.l.s4 1983009808
    %v1255 = vunpack.c.0.s8 %v1254
    %v1256 = vlaneseq
    %v1257 = vshrl.u32 %v1256, 7
    %v1258 = vsub.s32 %v1255, %v1257
    %v1259 = vrot.slane %v1245, %v1258
    %v1260 = vcombine.high %v1252, %v1252
    %v1264 = vpack.c.bf16 %v1252, %v1252
    %v1265 = vpack.c.bf16 %v1260, %v1260
    %v1266 = vpack.c.bf16 %v1259, %v1259
    %v1267 = vld [vmem:[%s8] sm:$0xf]
    %v1268 = vld [vmem:[%s8 + $0x4] sm:$0xf]
    %v1269 = vld [vmem:[%s8 + $0x8] sm:$0xf]
    %v1270 = vld [vmem:[%s8 + $0xc] sm:$0xf]
    %v1271 = vld [vmem:[%s8 + $0x10] sm:$0xf]
    %v1272 = vld [vmem:[%s8 + $0x14] sm:$0xf]
    %v1273 = vld [vmem:[%s8 + $0x18] sm:$0xf]
    %v1274 = vld [vmem:[%s8 + $0x1c] sm:$0xf]
    %v1275 = vld [vmem:[%s8 + $0x20] sm:$0xf]
    %v1276 = vld [vmem:[%s8 + $0x24] sm:$0xf]
    %v1277 = vld [vmem:[%s8 + $0x28] sm:$0xf]
    %v1278 = vld [vmem:[%s8 + $0x2c] sm:$0xf]
    %v1279 = vld [vmem:[%s8 + $0x30] sm:$0xf]
    %v1280 = vld [vmem:[%s8 + $0x34] sm:$0xf]
    %v1281 = vld [vmem:[%s8 + $0x38] sm:$0xf]
    %v1282 = vld [vmem:[%s8 + $0x3c] sm:$0xf]
    %v1283 = vld [vmem:[%s8 + $0x40] sm:$0xf]
    %v1284 = vld [vmem:[%s8 + $0x44] sm:$0xf]
    %v1285 = vld [vmem:[%s8 + $0x48] sm:$0xf]
    %v1286 = vld [vmem:[%s8 + $0x4c] sm:$0xf]
    %v1287 = vld [vmem:[%s8 + $0x50] sm:$0xf]
    %v1288 = vld [vmem:[%s8 + $0x54] sm:$0xf]
    %v1289 = vld [vmem:[%s8 + $0x58] sm:$0xf]
    %v1290 = vld [vmem:[%s8 + $0x5c] sm:$0xf]
    %v1291 = vld [vmem:[%s8 + $0x60] sm:$0xf]
    %v1292 = vld [vmem:[%s8 + $0x64] sm:$0xf]
    %v1293 = vld [vmem:[%s8 + $0x68] sm:$0xf]
    %v1294 = vld [vmem:[%s8 + $0x6c] sm:$0xf]
    %v1295 = vld [vmem:[%s8 + $0x70] sm:$0xf]
    %v1296 = vld [vmem:[%s8 + $0x74] sm:$0xf]
    %v1297 = vld [vmem:[%s8 + $0x78] sm:$0xf]
    %v1298 = vld [vmem:[%s8 + $0x7c] sm:$0xf]
    %v1299 = vld [vmem:[%s8 + $0x80] sm:$0xf]
    %v1300 = vld [vmem:[%s8 + $0x84] sm:$0xf]
    %v1301 = vld [vmem:[%s8 + $0x88] sm:$0xf]
    %v1302 = vld [vmem:[%s8 + $0x8c] sm:$0xf]
    %v1303 = vld [vmem:[%s8 + $0x90] sm:$0xf]
    %v1304 = vld [vmem:[%s8 + $0x94] sm:$0xf]
    %v1305 = vld [vmem:[%s8 + $0x98] sm:$0xf]
    %v1306 = vld [vmem:[%s8 + $0x9c] sm:$0xf]
    %v1307 = vld [vmem:[%s8 + $0xa0] sm:$0xf]
    %v1308 = vld [vmem:[%s8 + $0xa4] sm:$0xf]
    %v1309 = vld [vmem:[%s8 + $0xa8] sm:$0xf]
    %v1310 = vld [vmem:[%s8 + $0xac] sm:$0xf]
    %v1311 = vld [vmem:[%s8 + $0xb0] sm:$0xf]
    %v1312 = vld [vmem:[%s8 + $0xb4] sm:$0xf]
    %v1313 = vld [vmem:[%s8 + $0xb8] sm:$0xf]
    %v1314 = vld [vmem:[%s8 + $0xbc] sm:$0xf]
    %v1363 = vunpack.c.l.b16 %v1267
    %v1364 = vunpack.c.l.b16 %v1268
    %v1365 = vunpack.c.l.b16 %v1269
    %v1366 = vunpack.c.l.b16 %v1270
    %v1367 = vunpack.c.l.b16 %v1271
    %v1368 = vunpack.c.l.b16 %v1272
    %v1369 = vunpack.c.l.b16 %v1273
    %v1370 = vunpack.c.l.b16 %v1274
    %v1371 = vunpack.c.l.b16 %v1275
    %v1372 = vunpack.c.l.b16 %v1276
    %v1373 = vunpack.c.l.b16 %v1277
    %v1374 = vunpack.c.l.b16 %v1278
    %v1375 = vunpack.c.l.b16 %v1279
    %v1376 = vunpack.c.l.b16 %v1280
    %v1377 = vunpack.c.l.b16 %v1281
    %v1378 = vunpack.c.l.b16 %v1282
    %v1379 = vunpack.c.l.b16 %v1283
    %v1380 = vunpack.c.l.b16 %v1284
    %v1381 = vunpack.c.l.b16 %v1285
    %v1382 = vunpack.c.l.b16 %v1286
    %v1383 = vunpack.c.l.b16 %v1287
    %v1384 = vunpack.c.l.b16 %v1288
    %v1385 = vunpack.c.l.b16 %v1289
    %v1386 = vunpack.c.l.b16 %v1290
    %v1387 = vunpack.c.l.b16 %v1291
    %v1388 = vunpack.c.l.b16 %v1292
    %v1389 = vunpack.c.l.b16 %v1293
    %v1390 = vunpack.c.l.b16 %v1294
    %v1391 = vunpack.c.l.b16 %v1295
    %v1392 = vunpack.c.l.b16 %v1296
    %v1393 = vunpack.c.l.b16 %v1297
    %v1394 = vunpack.c.l.b16 %v1298
    %v1395 = vunpack.c.l.b16 %v1299
    %v1396 = vunpack.c.l.b16 %v1300
    %v1397 = vunpack.c.l.b16 %v1301
    %v1398 = vunpack.c.l.b16 %v1302
    %v1399 = vunpack.c.l.b16 %v1303
    %v1400 = vunpack.c.l.b16 %v1304
    %v1401 = vunpack.c.l.b16 %v1305
    %v1402 = vunpack.c.l.b16 %v1306
    %v1403 = vunpack.c.l.b16 %v1307
    %v1404 = vunpack.c.l.b16 %v1308
    %v1405 = vunpack.c.l.b16 %v1309
    %v1406 = vunpack.c.l.b16 %v1310
    %v1407 = vunpack.c.l.b16 %v1311
    %v1408 = vunpack.c.l.b16 %v1312
    %v1409 = vunpack.c.l.b16 %v1313
    %v1410 = vunpack.c.l.b16 %v1314
    %v1411 = vpack.c.b16 %v1364, %v1363
    %v1412 = vpack.c.b16 %v1366, %v1365
    %v1413 = vpack.c.b16 %v1368, %v1367
    %v1414 = vpack.c.b16 %v1370, %v1369
    %v1415 = vpack.c.b16 %v1372, %v1371
    %v1416 = vpack.c.b16 %v1374, %v1373
    %v1417 = vpack.c.b16 %v1376, %v1375
    %v1418 = vpack.c.b16 %v1378, %v1377
    %v1419 = vpack.c.b16 %v1380, %v1379
    %v1420 = vpack.c.b16 %v1382, %v1381
    %v1421 = vpack.c.b16 %v1384, %v1383
    %v1422 = vpack.c.b16 %v1386, %v1385
    %v1423 = vpack.c.b16 %v1388, %v1387
    %v1424 = vpack.c.b16 %v1390, %v1389
    %v1425 = vpack.c.b16 %v1392, %v1391
    %v1426 = vpack.c.b16 %v1394, %v1393
    %v1427 = vpack.c.b16 %v1396, %v1395
    %v1428 = vpack.c.b16 %v1398, %v1397
    %v1429 = vpack.c.b16 %v1400, %v1399
    %v1430 = vpack.c.b16 %v1402, %v1401
    %v1431 = vpack.c.b16 %v1404, %v1403
    %v1432 = vpack.c.b16 %v1406, %v1405
    %v1433 = vpack.c.b16 %v1408, %v1407
    %v1434 = vpack.c.b16 %v1410, %v1409
    %1459 = vmatprep.subr.bf16.mxu0 0
    %1460 = vmatpush1.bf16.msra.mxu0 %v1418
    %1461 = vmatprep.subr.bf16.mxu0 0
    %1462 = vmatpush1.bf16.msra.mxu0 %v1417
    %1463 = vmatprep.subr.bf16.mxu0 0
    %1464 = vmatpush1.bf16.msra.mxu0 %v1416
    %1465 = vmatprep.subr.bf16.mxu0 0
    %1466 = vmatpush1.bf16.msra.mxu0 %v1415
    %1467 = vmatprep.subr.bf16.mxu0 0
    %1468 = vmatpush1.bf16.msra.mxu0 %v1414
    %1469 = vmatprep.subr.bf16.mxu0 0
    %1470 = vmatpush1.bf16.msra.mxu0 %v1413
    %1471 = vmatprep.subr.bf16.mxu0 0
    %1472 = vmatpush1.bf16.msra.mxu0 %v1412
    %1473 = vmatprep.subr.bf16.mxu0 0
    %1474 = vmatpush1.bf16.msra.mxu0 %v1411
    %1475 = vmatprep.subr.bf16.mxu0 0
    %1476 = vmatpush2.bf16.msra.mxu0 %v1426
    %1477 = vmatprep.subr.bf16.mxu0 0
    %1478 = vmatpush2.bf16.msra.mxu0 %v1425
    %1479 = vmatprep.subr.bf16.mxu0 0
    %1480 = vmatpush2.bf16.msra.mxu0 %v1424
    %1481 = vmatprep.subr.bf16.mxu0 0
    %1482 = vmatpush2.bf16.msra.mxu0 %v1423
    %1483 = vmatprep.subr.bf16.mxu0 0
    %1484 = vmatpush2.bf16.msra.mxu0 %v1422
    %1485 = vmatprep.subr.bf16.mxu0 0
    %1486 = vmatpush2.bf16.msra.mxu0 %v1421
    %1487 = vmatprep.subr.bf16.mxu0 0
    %1488 = vmatpush2.bf16.msra.mxu0 %v1420
    %1489 = vmatprep.subr.bf16.mxu0 0
    %1490 = vmatpush2.bf16.msra.mxu0 %v1419
    %1491 = vmatprep.mubr.bf16.mxu0 %v1265
    %1492 = vmatmul.mubr.bf16.gmra.mxu0 %v1264
    %v1493 = vpop.f32.mrf.mxu0
    %v1494 = vadd.f32 0.0, %v1493
    %v1495 = vpop.f32.mrf.mxu0
    %v1496 = vpop.f32.mrf.mxu0
    %v1497 = vpop.f32.mrf.mxu0
    %1498 = vdwg.mxu0
    %1499 = vmatprep.subr.bf16.mxu0 0
    %1500 = vmatpush1.bf16.msra.mxu0 %v1434
    %1501 = vmatprep.subr.bf16.mxu0 0
    %1502 = vmatpush1.bf16.msra.mxu0 %v1433
    %1503 = vmatprep.subr.bf16.mxu0 0
    %1504 = vmatpush1.bf16.msra.mxu0 %v1432
    %1505 = vmatprep.subr.bf16.mxu0 0
    %1506 = vmatpush1.bf16.msra.mxu0 %v1431
    %1507 = vmatprep.subr.bf16.mxu0 0
    %1508 = vmatpush1.bf16.msra.mxu0 %v1430
    %1509 = vmatprep.subr.bf16.mxu0 0
    %1510 = vmatpush1.bf16.msra.mxu0 %v1429
    %1511 = vmatprep.subr.bf16.mxu0 0
    %1512 = vmatpush1.bf16.msra.mxu0 %v1428
    %1513 = vmatprep.subr.bf16.mxu0 0
    %1514 = vmatpush1.bf16.msra.mxu0 %v1427
    %1515 = vmatprep.subr.bf16.mxu0 0
    %1516 = vmatpush2.bf16.msra.mxu0 0
    %1517 = vmatprep.subr.bf16.mxu0 0
    %1518 = vmatpush2.bf16.msra.mxu0 0
    %1519 = vmatprep.subr.bf16.mxu0 0
    %1520 = vmatpush2.bf16.msra.mxu0 0
    %1521 = vmatprep.subr.bf16.mxu0 0
    %1522 = vmatpush2.bf16.msra.mxu0 0
    %1523 = vmatprep.subr.bf16.mxu0 0
    %1524 = vmatpush2.bf16.msra.mxu0 0
    %1525 = vmatprep.subr.bf16.mxu0 0
    %1526 = vmatpush2.bf16.msra.mxu0 0
    %1527 = vmatprep.subr.bf16.mxu0 0
    %1528 = vmatpush2.bf16.msra.mxu0 0
    %1529 = vmatprep.subr.bf16.mxu0 0
    %1530 = vmatpush2.bf16.msra.mxu0 0
    %1531 = vmatprep.mubr.bf16.mxu0 0
    %1532 = vmatmul.mubr.bf16.gmra.mxu0 %v1266
    %v1533 = vpop.f32.mrf.mxu0
    %v1534 = vadd.f32 %v1494, %v1533
    %v1535 = vpop.f32.mrf.mxu0
    %v1536 = vpop.f32.mrf.mxu0
    %v1537 = vpop.f32.mrf.mxu0
    %1538 = vdwg.mxu0
    %v1541 = vunpack.c.l.b16 %v1225
    %v1542 = vunpack.c.l.b16 %v1226
    %v1543 = vsel %vm231, %v1542, %v1541
    %v1544 = vpack.c.b16 %v1543, %v1543
    %v1562 = vunpack.c.l.b16 %v1227
    %v1563 = vunpack.c.l.b16 %v1228
    %v1564 = vunpack.c.l.b16 %v1229
    %v1565 = vunpack.c.l.b16 %v1230
    %v1566 = vunpack.c.l.b16 %v1231
    %v1567 = vunpack.c.l.b16 %v1232
    %v1568 = vunpack.c.l.b16 %v1233
    %v1569 = vunpack.c.l.b16 %v1234
    %v1570 = vunpack.c.l.b16 %v1235
    %v1571 = vunpack.c.l.b16 %v1236
    %v1572 = vunpack.c.l.b16 %v1237
    %v1573 = vunpack.c.l.b16 %v1238
    %v1574 = vunpack.c.l.b16 %v1239
    %v1575 = vunpack.c.l.b16 %v1240
    %v1576 = vunpack.c.l.b16 %v1241
    %v1577 = vunpack.c.l.b16 %v1242
    %v1578 = vpack.c.b16 %v1563, %v1562
    %v1579 = vpack.c.b16 %v1565, %v1564
    %v1580 = vpack.c.b16 %v1567, %v1566
    %v1581 = vpack.c.b16 %v1569, %v1568
    %v1582 = vpack.c.b16 %v1571, %v1570
    %v1583 = vpack.c.b16 %v1573, %v1572
    %v1584 = vpack.c.b16 %v1575, %v1574
    %v1585 = vpack.c.b16 %v1577, %v1576
    %1594 = vmatprep.subr.bf16.mxu0 0
    %1595 = vmatpush1.bf16.msra.mxu0 %v1585
    %1596 = vmatprep.subr.bf16.mxu0 0
    %1597 = vmatpush1.bf16.msra.mxu0 %v1584
    %1598 = vmatprep.subr.bf16.mxu0 0
    %1599 = vmatpush1.bf16.msra.mxu0 %v1583
    %1600 = vmatprep.subr.bf16.mxu0 0
    %1601 = vmatpush1.bf16.msra.mxu0 %v1582
    %1602 = vmatprep.subr.bf16.mxu0 0
    %1603 = vmatpush1.bf16.msra.mxu0 %v1581
    %1604 = vmatprep.subr.bf16.mxu0 0
    %1605 = vmatpush1.bf16.msra.mxu0 %v1580
    %1606 = vmatprep.subr.bf16.mxu0 0
    %1607 = vmatpush1.bf16.msra.mxu0 %v1579
    %1608 = vmatprep.subr.bf16.mxu0 0
    %1609 = vmatpush1.bf16.msra.mxu0 %v1578
    %1610 = vmatprep.subr.bf16.mxu0 0
    %1611 = vmatpush2.bf16.msra.mxu0 0
    %1612 = vmatprep.subr.bf16.mxu0 0
    %1613 = vmatpush2.bf16.msra.mxu0 0
    %1614 = vmatprep.subr.bf16.mxu0 0
    %1615 = vmatpush2.bf16.msra.mxu0 0
    %1616 = vmatprep.subr.bf16.mxu0 0
    %1617 = vmatpush2.bf16.msra.mxu0 0
    %1618 = vmatprep.subr.bf16.mxu0 0
    %1619 = vmatpush2.bf16.msra.mxu0 0
    %1620 = vmatprep.subr.bf16.mxu0 0
    %1621 = vmatpush2.bf16.msra.mxu0 0
    %1622 = vmatprep.subr.bf16.mxu0 0
    %1623 = vmatpush2.bf16.msra.mxu0 0
    %1624 = vmatprep.subr.bf16.mxu0 0
    %1625 = vmatpush2.bf16.msra.mxu0 0
    %1626 = vmatprep.mubr.bf16.mxu0 0
    %1627 = vmatmul.mubr.bf16.gmra.mxu0 %v1544
    %v1628 = vpop.f32.mrf.mxu0
    %v1629 = vadd.f32 %v1534, %v1628
    %v1630 = vpop.f32.mrf.mxu0
    %v1631 = vpop.f32.mrf.mxu0
    %v1632 = vpop.f32.mrf.mxu0
    %1633 = vdwg.mxu0
    %v1634 = vld [vmem:[%s9] sm:$0x1]
    %v1636 = vlaneseq
    %v1637 = vshrl.u32 %v1636, 7
    %v1638 = vsub.s32 0, %v1637
    %v1639 = vrot.slane %v1634, %v1638
    %v1641 = vadd.f32 %v1629, %v1639
    %v1642 = vmax.f32 %v1641, 0.0
    %v1643 = vpack.c.bf16 %v1642, %v1642
    %v1644 = vld [vmem:[%s10] sm:$0xf]
    %v1645 = vld [vmem:[%s10 + $0x4] sm:$0xf]
    %v1646 = vld [vmem:[%s10 + $0x8] sm:$0xf]
    %v1647 = vld [vmem:[%s10 + $0xc] sm:$0xf]
    %v1648 = vld [vmem:[%s10 + $0x10] sm:$0xf]
    %v1649 = vld [vmem:[%s10 + $0x14] sm:$0xf]
    %v1650 = vld [vmem:[%s10 + $0x18] sm:$0xf]
    %v1651 = vld [vmem:[%s10 + $0x1c] sm:$0xf]
    %v1652 = vld [vmem:[%s10 + $0x20] sm:$0xf]
    %v1653 = vld [vmem:[%s10 + $0x24] sm:$0xf]
    %v1654 = vld [vmem:[%s10 + $0x28] sm:$0xf]
    %v1655 = vld [vmem:[%s10 + $0x2c] sm:$0xf]
    %v1656 = vld [vmem:[%s10 + $0x30] sm:$0xf]
    %v1657 = vld [vmem:[%s10 + $0x34] sm:$0xf]
    %v1658 = vld [vmem:[%s10 + $0x38] sm:$0xf]
    %v1659 = vld [vmem:[%s10 + $0x3c] sm:$0xf]
    %v1660 = vld [vmem:[%s11] sm:$0x1]
    %v1662 = vlaneseq
    %v1663 = vshrl.u32 %v1662, 7
    %v1664 = vsub.s32 0, %v1663
    %v1665 = vrot.slane %v1660, %v1664
    %v1683 = vunpack.c.l.b16 %v1644
    %v1684 = vunpack.c.l.b16 %v1645
    %v1685 = vunpack.c.l.b16 %v1646
    %v1686 = vunpack.c.l.b16 %v1647
    %v1687 = vunpack.c.l.b16 %v1648
    %v1688 = vunpack.c.l.b16 %v1649
    %v1689 = vunpack.c.l.b16 %v1650
    %v1690 = vunpack.c.l.b16 %v1651
    %v1691 = vunpack.c.l.b16 %v1652
    %v1692 = vunpack.c.l.b16 %v1653
    %v1693 = vunpack.c.l.b16 %v1654
    %v1694 = vunpack.c.l.b16 %v1655
    %v1695 = vunpack.c.l.b16 %v1656
    %v1696 = vunpack.c.l.b16 %v1657
    %v1697 = vunpack.c.l.b16 %v1658
    %v1698 = vunpack.c.l.b16 %v1659
    %v1699 = vpack.c.b16 %v1684, %v1683
    %v1700 = vpack.c.b16 %v1686, %v1685
    %v1701 = vpack.c.b16 %v1688, %v1687
    %v1702 = vpack.c.b16 %v1690, %v1689
    %v1703 = vpack.c.b16 %v1692, %v1691
    %v1704 = vpack.c.b16 %v1694, %v1693
    %v1705 = vpack.c.b16 %v1696, %v1695
    %v1706 = vpack.c.b16 %v1698, %v1697
    %1715 = vmatprep.subr.bf16.mxu0 0
    %1716 = vmatpush1.bf16.msra.mxu0 %v1706
    %1717 = vmatprep.subr.bf16.mxu0 0
    %1718 = vmatpush1.bf16.msra.mxu0 %v1705
    %1719 = vmatprep.subr.bf16.mxu0 0
    %1720 = vmatpush1.bf16.msra.mxu0 %v1704
    %1721 = vmatprep.subr.bf16.mxu0 0
    %1722 = vmatpush1.bf16.msra.mxu0 %v1703
    %1723 = vmatprep.subr.bf16.mxu0 0
    %1724 = vmatpush1.bf16.msra.mxu0 %v1702
    %1725 = vmatprep.subr.bf16.mxu0 0
    %1726 = vmatpush1.bf16.msra.mxu0 %v1701
    %1727 = vmatprep.subr.bf16.mxu0 0
    %1728 = vmatpush1.bf16.msra.mxu0 %v1700
    %1729 = vmatprep.subr.bf16.mxu0 0
    %1730 = vmatpush1.bf16.msra.mxu0 %v1699
    %1731 = vmatprep.subr.bf16.mxu0 0
    %1732 = vmatpush2.bf16.msra.mxu0 0
    %1733 = vmatprep.subr.bf16.mxu0 0
    %1734 = vmatpush2.bf16.msra.mxu0 0
    %1735 = vmatprep.subr.bf16.mxu0 0
    %1736 = vmatpush2.bf16.msra.mxu0 0
    %1737 = vmatprep.subr.bf16.mxu0 0
    %1738 = vmatpush2.bf16.msra.mxu0 0
    %1739 = vmatprep.subr.bf16.mxu0 0
    %1740 = vmatpush2.bf16.msra.mxu0 0
    %1741 = vmatprep.subr.bf16.mxu0 0
    %1742 = vmatpush2.bf16.msra.mxu0 0
    %1743 = vmatprep.subr.bf16.mxu0 0
    %1744 = vmatpush2.bf16.msra.mxu0 0
    %1745 = vmatprep.subr.bf16.mxu0 0
    %1746 = vmatpush2.bf16.msra.mxu0 0
    %1747 = vmatprep.mubr.bf16.mxu0 0
    %1748 = vmatmul.mubr.bf16.gmra.mxu0 %v1643
    %v1749 = vpop.f32.mrf.mxu0
    %v1750 = vadd.f32 %v1665, %v1749
    %v1751 = vpop.f32.mrf.mxu0
    %v1752 = vpop.f32.mrf.mxu0
    %v1753 = vpop.f32.mrf.mxu0
    %1754 = vdwg.mxu0
    %v1755 = vmax.f32 %v1750, 0.0
    %v1756 = vpack.c.bf16 %v1755, %v1755
    %v1757 = vld [vmem:[%s12] sm:$0xf]
    %v1758 = vld [vmem:[%s12 + $0x4] sm:$0xf]
    %v1759 = vld [vmem:[%s12 + $0x8] sm:$0xf]
    %v1760 = vld [vmem:[%s12 + $0xc] sm:$0xf]
    %v1761 = vld [vmem:[%s12 + $0x10] sm:$0xf]
    %v1762 = vld [vmem:[%s12 + $0x14] sm:$0xf]
    %v1763 = vld [vmem:[%s12 + $0x18] sm:$0xf]
    %v1764 = vld [vmem:[%s12 + $0x1c] sm:$0xf]
    %v1765 = vld [vmem:[%s12 + $0x20] sm:$0xf]
    %v1766 = vld [vmem:[%s12 + $0x24] sm:$0xf]
    %v1767 = vld [vmem:[%s12 + $0x28] sm:$0xf]
    %v1768 = vld [vmem:[%s12 + $0x2c] sm:$0xf]
    %v1769 = vld [vmem:[%s12 + $0x30] sm:$0xf]
    %v1770 = vld [vmem:[%s12 + $0x34] sm:$0xf]
    %v1771 = vld [vmem:[%s12 + $0x38] sm:$0xf]
    %v1772 = vld [vmem:[%s12 + $0x3c] sm:$0xf]
    %v1773 = vld [vmem:[%s13] sm:$0x1]
    %v1775 = vlaneseq
    %v1776 = vshrl.u32 %v1775, 7
    %v1777 = vsub.s32 0, %v1776
    %v1778 = vrot.slane %v1773, %v1777
    %v1796 = vunpack.c.l.b16 %v1757
    %v1797 = vunpack.c.l.b16 %v1758
    %v1798 = vunpack.c.l.b16 %v1759
    %v1799 = vunpack.c.l.b16 %v1760
    %v1800 = vunpack.c.l.b16 %v1761
    %v1801 = vunpack.c.l.b16 %v1762
    %v1802 = vunpack.c.l.b16 %v1763
    %v1803 = vunpack.c.l.b16 %v1764
    %v1804 = vunpack.c.l.b16 %v1765
    %v1805 = vunpack.c.l.b16 %v1766
    %v1806 = vunpack.c.l.b16 %v1767
    %v1807 = vunpack.c.l.b16 %v1768
    %v1808 = vunpack.c.l.b16 %v1769
    %v1809 = vunpack.c.l.b16 %v1770
    %v1810 = vunpack.c.l.b16 %v1771
    %v1811 = vunpack.c.l.b16 %v1772
    %v1812 = vpack.c.b16 %v1797, %v1796
    %v1813 = vpack.c.b16 %v1799, %v1798
    %v1814 = vpack.c.b16 %v1801, %v1800
    %v1815 = vpack.c.b16 %v1803, %v1802
    %v1816 = vpack.c.b16 %v1805, %v1804
    %v1817 = vpack.c.b16 %v1807, %v1806
    %v1818 = vpack.c.b16 %v1809, %v1808
    %v1819 = vpack.c.b16 %v1811, %v1810
    %1828 = vmatprep.subr.bf16.mxu0 0
    %1829 = vmatpush1.bf16.msra.mxu0 %v1819
    %1830 = vmatprep.subr.bf16.mxu0 0
    %1831 = vmatpush1.bf16.msra.mxu0 %v1818
    %1832 = vmatprep.subr.bf16.mxu0 0
    %1833 = vmatpush1.bf16.msra.mxu0 %v1817
    %1834 = vmatprep.subr.bf16.mxu0 0
    %1835 = vmatpush1.bf16.msra.mxu0 %v1816
    %1836 = vmatprep.subr.bf16.mxu0 0
    %1837 = vmatpush1.bf16.msra.mxu0 %v1815
    %1838 = vmatprep.subr.bf16.mxu0 0
    %1839 = vmatpush1.bf16.msra.mxu0 %v1814
    %1840 = vmatprep.subr.bf16.mxu0 0
    %1841 = vmatpush1.bf16.msra.mxu0 %v1813
    %1842 = vmatprep.subr.bf16.mxu0 0
    %1843 = vmatpush1.bf16.msra.mxu0 %v1812
    %1844 = vmatprep.subr.bf16.mxu0 0
    %1845 = vmatpush2.bf16.msra.mxu0 0
    %1846 = vmatprep.subr.bf16.mxu0 0
    %1847 = vmatpush2.bf16.msra.mxu0 0
    %1848 = vmatprep.subr.bf16.mxu0 0
    %1849 = vmatpush2.bf16.msra.mxu0 0
    %1850 = vmatprep.subr.bf16.mxu0 0
    %1851 = vmatpush2.bf16.msra.mxu0 0
    %1852 = vmatprep.subr.bf16.mxu0 0
    %1853 = vmatpush2.bf16.msra.mxu0 0
    %1854 = vmatprep.subr.bf16.mxu0 0
    %1855 = vmatpush2.bf16.msra.mxu0 0
    %1856 = vmatprep.subr.bf16.mxu0 0
    %1857 = vmatpush2.bf16.msra.mxu0 0
    %1858 = vmatprep.subr.bf16.mxu0 0
    %1859 = vmatpush2.bf16.msra.mxu0 0
    %1860 = vmatprep.mubr.bf16.mxu0 0
    %1861 = vmatmul.mubr.bf16.gmra.mxu0 %v1756
    %v1862 = vpop.f32.mrf.mxu0
    %v1863 = vadd.f32 %v1778, %v1862
    %v1864 = vpop.f32.mrf.mxu0
    %v1865 = vpop.f32.mrf.mxu0
    %v1866 = vpop.f32.mrf.mxu0
    %1867 = vdwg.mxu0
    %1868 = vst [vmem:[#allocation7] sm:$0x3] %v1863
    // Predicated region
    $region62: #{attention_model_forward.1} parent=1 // pred_check
      _
    $region63: #{attention_model_forward.1} parent=1 // pred_check_branch
      %1870 = sbr.rel (0) target = $region65
    $region64: #{attention_model_forward.1} parent=1 // pred_region
      %s1872 = ssub.s32 32, 32
      %1873 = vsyncadd [#allocation5], %s1872
      %s1875 = sshll.u32 [#allocation7], 4
      %s1876 = int_to_ptr.vmem [resolvable:$true] %s1875
      %1878 = dma.vmem_to_hbm [thread:$0]  %s1876, 32, %s14, [#allocation5]
    $region65: #{attention_model_forward.1} parent=1 // pred_fallthru
      _
    // Predicated region
    $region66: #{attention_model_forward.1} parent=1 // pred_check
      _
    $region67: #{attention_model_forward.1} parent=1 // pred_check_branch
      %1880 = sbr.rel (0) target = $region69
    $region68: #{attention_model_forward.1} parent=1 // pred_region
      %1881 = dma.done [#allocation5], 32
    $region69: #{attention_model_forward.1} parent=1 // pred_fallthru
      _
    %1882 = vsyncpa [#allocation5], 1
    %1883 = vsyncpa [#allocation6], 1

</llo_original>
